<compile_context>
chip_gen: v6e
topology: v6e:2x2x1
jax: 0.10.0
libtpu: 0.0.40
codegen_flags: <defaults>
</compile_context>

<pallas_src>
import math
from functools import partial

import jax
import jax.numpy as jnp
import numpy as np
from jax.experimental import pallas as pl
from jax.experimental.pallas import tpu as pltpu


_PARAM_ORDER = ["wp", "bp", "wq", "bq", "wk", "bk", "wv", "bv",
                "wo", "bo", "w1", "b1", "w2", "b2",
                "g1", "be1", "g2", "be2"]

# weight matrices that get pre-cast to bf16 in the wrapper
_BF16_PARAMS = {"wp", "wq", "wk", "wv", "wo", "w1", "w2"}


def _graph_transformer_kernel(
    x_ref, adj_ref,
    wp_ref, bp_ref,
    wq_ref, bq_ref, wk_ref, bk_ref, wv_ref, bv_ref,
    wo_ref, bo_ref,
    w1_ref, b1_ref, w2_ref, b2_ref,
    g1_ref, be1_ref, g2_ref, be2_ref,
    out_ref,
    *, num_heads, head_dim,
):
    f32 = jnp.float32
    bf16 = jnp.bfloat16
    mm_dn = (((1,), (0,)), ((), ()))   # A @ B
    nt_dn = (((1,), (1,)), ((), ()))   # A @ B^T (contract last dims, no transpose)

    def mm(a, b):
        # bf16 MXU operands, f32 accumulation.
        return jax.lax.dot_general(a.astype(bf16), b.astype(bf16), mm_dn,
                                   preferred_element_type=f32)

    x_in = x_ref[0]          # (N, Fin) f32
    adj = adj_ref[0]         # (N, N)  f32 {0, 1}

    # input projection + Q/K/V projections (weights already bf16 -> no-op casts)
    x = mm(x_in, wp_ref[...]) + bp_ref[...]
    q = mm(x, wq_ref[...]) + bq_ref[...]
    k = mm(x, wk_ref[...]) + bk_ref[...]
    v = mm(x, wv_ref[...]) + bv_ref[...]

    # cast activations for the MXU once, slice per head afterwards
    q16 = q.astype(bf16)
    k16 = k.astype(bf16)
    v16 = v.astype(bf16)

    scale = jnp.float32(1.0 / math.sqrt(head_dim))
    neg_big = jnp.float32(-1.0e9)
    masked = adj == 0.0      # shared across heads (mask math stays f32)

    # per-head masked scores (static unroll over H tiny A@B^T matmuls)
    scores = []
    for h in range(num_heads):
        sl = slice(h * head_dim, (h + 1) * head_dim)
        s = jax.lax.dot_general(q16[:, sl], k16[:, sl], nt_dn,
                                preferred_element_type=f32) * scale
        scores.append(jnp.where(masked, neg_big, s))

    # softmax over the HEAD axis (matches the PyTorch dim=1 softmax), f32
    mx = scores[0]
    for h in range(1, num_heads):
        mx = jnp.maximum(mx, scores[h])
    exps = [jnp.exp(s - mx) for s in scores]
    denom = exps[0]
    for h in range(1, num_heads):
        denom = denom + exps[h]
    inv = pl.reciprocal(denom, approx=True)        # EUP slot, ~free

    # fuse (softmax weight) @ V_h @ Wo_h per head; accumulate the mha_proj
    # directly as one wide (N, F) buffer -> no concat, no narrow stores.
    proj = jnp.zeros(x.shape, f32)
    for h in range(num_heads):
        sl = slice(h * head_dim, (h + 1) * head_dim)
        wh = (exps[h] * inv).astype(bf16)                               # (N, N)
        oh = jax.lax.dot_general(wh, v16[:, sl], mm_dn,
                                 preferred_element_type=f32)            # (N, D)
        proj = proj + jax.lax.dot_general(
            oh.astype(bf16), wo_ref[sl, :], mm_dn,
            preferred_element_type=f32)                                 # (N, F)
    attn = proj + bo_ref[...]

    # residual + LayerNorm 1 (f32)
    y = x + attn
    mu = jnp.mean(y, axis=-1, keepdims=True)
    var = jnp.mean(jnp.square(y - mu), axis=-1, keepdims=True)
    y = (y - mu) * jax.lax.rsqrt(var + 1e-5)
    y = y * g1_ref[...] + be1_ref[...]

    # FFN: Linear(F, 2F) -> ReLU -> Linear(2F, F)
    h1 = mm(y, w1_ref[...]) + b1_ref[...]
    h1 = jnp.maximum(h1, 0.0)
    ff = mm(h1, w2_ref[...]) + b2_ref[...]

    # residual + LayerNorm 2 (f32), single wide store
    z = y + ff
    mu2 = jnp.mean(z, axis=-1, keepdims=True)
    var2 = jnp.mean(jnp.square(z - mu2), axis=-1, keepdims=True)
    z = (z - mu2) * jax.lax.rsqrt(var2 + 1e-5)
    out_ref[0] = z * g2_ref[...] + be2_ref[...]


def init_params(key, in_features, out_features):
    ks = jax.random.split(key, 8)
    s = 0.1
    f32 = jnp.float32
    return {
        "wp": jax.random.normal(ks[0], (in_features, out_features), f32) * s,
        "bp": jnp.zeros((1, out_features), f32),
        "wq": jax.random.normal(ks[1], (out_features, out_features), f32) * s,
        "bq": jnp.zeros((1, out_features), f32),
        "wk": jax.random.normal(ks[2], (out_features, out_features), f32) * s,
        "bk": jnp.zeros((1, out_features), f32),
        "wv": jax.random.normal(ks[3], (out_features, out_features), f32) * s,
        "bv": jnp.zeros((1, out_features), f32),
        "wo": jax.random.normal(ks[4], (out_features, out_features), f32) * s,
        "bo": jnp.zeros((1, out_features), f32),
        "w1": jax.random.normal(ks[5], (out_features, 2 * out_features), f32) * s,
        "b1": jnp.zeros((1, 2 * out_features), f32),
        "w2": jax.random.normal(ks[6], (2 * out_features, out_features), f32) * s,
        "b2": jnp.zeros((1, out_features), f32),
        "g1": jnp.ones((1, out_features), f32),
        "be1": jnp.zeros((1, out_features), f32),
        "g2": jnp.ones((1, out_features), f32),
        "be2": jnp.zeros((1, out_features), f32),
    }


def graph_transformer_layer_batched(x, adj, params, num_heads):
    """x: (B, N, Fin) f32; adj: (B, N, N) f32 {0,1}. One graph per grid step."""
    B, N, Fin = x.shape
    F = params["wq"].shape[1]
    D = F // num_heads
    assert num_heads * D == F

    # pre-cast the big weight matrices to bf16 (MXU operands anyway): halves
    # their DMA bytes and removes in-kernel casts. Biases / LN params stay f32.
    param_list = [
        params[k].astype(jnp.bfloat16) if k in _BF16_PARAMS else params[k]
        for k in _PARAM_ORDER
    ]
    args = [x.astype(jnp.float32), adj.astype(jnp.float32)] + param_list

    in_specs = [
        pl.BlockSpec((1, N, Fin), lambda b: (b, 0, 0)),
        pl.BlockSpec((1, N, N), lambda b: (b, 0, 0)),
    ]
    for p in param_list:
        # full-resident weights: block = full shape, block index fixed at 0
        in_specs.append(pl.BlockSpec(p.shape, lambda b, _nd=p.ndim: (0,) * _nd))

    out_spec = pl.BlockSpec((1, N, F), lambda b: (b, 0, 0))

    # advisory cost hint for XLA's scheduler around the custom call
    flops = B * (2 * N * Fin * F               # input proj
                 + 6 * N * F * F               # q, k, v
                 + 4 * num_heads * N * N * D   # scores + attn@v
                 + 2 * N * F * F               # mha proj
                 + 8 * N * F * F)              # ffn
    transcendentals = B * (num_heads * N * N + 2 * N)
    bytes_accessed = (4 * B * (N * Fin + N * N + N * F)
                      + sum(int(p.size) * p.dtype.itemsize for p in param_list))

    return pl.pallas_call(
        partial(_graph_transformer_kernel, num_heads=num_heads, head_dim=D),
        out_shape=jax.ShapeDtypeStruct((B, N, F), jnp.float32),
        grid_spec=pltpu.PrefetchScalarGridSpec(
            num_scalar_prefetch=0,
            grid=(B,),
            in_specs=in_specs,
            out_specs=out_spec,
        ),
        compiler_params=pltpu.CompilerParams(
            dimension_semantics=("parallel",),       # megacore over graphs
            vmem_limit_bytes=32 * 1024 * 1024,       # <= physical on v5e/v6e/v7x
        ),
        cost_estimate=pl.CostEstimate(
            flops=int(flops),
            transcendentals=int(transcendentals),
            bytes_accessed=int(bytes_accessed),
        ),
    )(*args)


def graph_transformer_layer(x, edge_index, params, num_heads):
    """Original module API: single graph, edge_index (2, E)."""
    n = x.shape[0]
    # glue: dense adjacency mask from edge_index (scatter stays in plain JAX)
    adj = jnp.zeros((n, n), jnp.float32).at[edge_index[0], edge_index[1]].set(1.0)
    return graph_transformer_layer_batched(x[None], adj[None], params, num_heads)[0]


# ---------------------------------------------------------------------------
# pure-JAX reference (mirrors the PyTorch module, incl. head-axis softmax)
# ---------------------------------------------------------------------------
def _layernorm_ref(x, g, b):
    mu = jnp.mean(x, axis=-1, keepdims=True)
    var = jnp.mean((x - mu) ** 2, axis=-1, keepdims=True)
    return (x - mu) * jax.lax.rsqrt(var + 1e-5) * g + b


def reference(x, adj, p, num_heads):
    n = x.shape[0]
    F = p["wq"].shape[1]
    D = F // num_heads
    x = x @ p["wp"] + p["bp"][0]
    q = (x @ p["wq"] + p["bq"][0]).reshape(n, num_heads, D)
    k = (x @ p["wk"] + p["bk"][0]).reshape(n, num_heads, D)
    v = (x @ p["wv"] + p["bv"][0]).reshape(n, num_heads, D)
    s = jnp.einsum("nhd,mhd->nhm", q, k) / math.sqrt(D)
    s = jnp.where(adj[:, None, :] == 0.0, -1.0e9, s)
    w = jax.nn.softmax(s, axis=1)  # softmax over heads, like the PyTorch code
    o = jnp.einsum("nhm,mhd->nhd", w, v).reshape(n, F)
    o = o @ p["wo"] + p["bo"][0]
    y = _layernorm_ref(x + o, p["g1"][0], p["be1"][0])
    ff = jnp.maximum(y @ p["w1"] + p["b1"][0], 0.0) @ p["w2"] + p["b2"][0]
    return _layernorm_ref(y + ff, p["g2"][0], p["be2"][0])


if __name__ == "__main__":
    N = 8              # nodes per graph
    IN_FEATURES = 16
    OUT_FEATURES = 32
    NUM_HEADS = 4
    BATCH = 4          # graphs batched through the grid

    key = jax.random.PRNGKey(0)
    kx, kp = jax.random.split(key)
    xs = jax.random.normal(kx, (BATCH, N, IN_FEATURES), jnp.float32)

    # deterministic per-graph edge lists: self loops + ring(+1) + ring(+(2+g))
    adj_np = np.zeros((BATCH, N, N), np.float32)
    for g in range(BATCH):
        for i in range(N):
            for off in (0, 1, 2 + g):
                adj_np[g, i, (i + off) % N] = 1.0
    adjs = jnp.asarray(adj_np)

    params = init_params(kp, IN_FEATURES, OUT_FEATURES)

    # batched path (one pallas_call, grid over graphs)
    out_b = jax.block_until_ready(
        graph_transformer_layer_batched(xs, adjs, params, NUM_HEADS))

    # tolerance accounts for bf16 MXU operands + approx reciprocal
    for g in range(BATCH):
        ref = reference(xs[g], adjs[g], params, NUM_HEADS)
        np.testing.assert_allclose(np.asarray(out_b[g]), np.asarray(ref),
                                   rtol=5e-2, atol=5e-2)

    # original module API (single graph, edge_index) -> must match batched run
    src, dst = np.nonzero(adj_np[0])
    edge_index = jnp.asarray(np.stack([src, dst]).astype(np.int32))
    out_1 = jax.block_until_ready(
        graph_transformer_layer(xs[0], edge_index, params, NUM_HEADS))
    np.testing.assert_allclose(np.asarray(out_1), np.asarray(out_b[0]),
                               rtol=1e-5, atol=1e-5)

    print("KERNEL_OK")
</pallas_src>

<mosaic_0001>
module attributes {stable_mosaic.version = 11 : i64} {
  func.func @_graph_transformer_kernel(%arg0: i32, %arg1: memref<1x8x16xf32, #tpu.memory_space<vmem>>, %arg2: memref<1x8x8xf32, #tpu.memory_space<vmem>>, %arg3: memref<16x32xbf16, #tpu.memory_space<vmem>>, %arg4: memref<1x32xf32, #tpu.memory_space<vmem>>, %arg5: memref<32x32xbf16, #tpu.memory_space<vmem>>, %arg6: memref<1x32xf32, #tpu.memory_space<vmem>>, %arg7: memref<32x32xbf16, #tpu.memory_space<vmem>>, %arg8: memref<1x32xf32, #tpu.memory_space<vmem>>, %arg9: memref<32x32xbf16, #tpu.memory_space<vmem>>, %arg10: memref<1x32xf32, #tpu.memory_space<vmem>>, %arg11: memref<32x32xbf16, #tpu.memory_space<vmem>>, %arg12: memref<1x32xf32, #tpu.memory_space<vmem>>, %arg13: memref<32x64xbf16, #tpu.memory_space<vmem>>, %arg14: memref<1x64xf32, #tpu.memory_space<vmem>>, %arg15: memref<64x32xbf16, #tpu.memory_space<vmem>>, %arg16: memref<1x32xf32, #tpu.memory_space<vmem>>, %arg17: memref<1x32xf32, #tpu.memory_space<vmem>>, %arg18: memref<1x32xf32, #tpu.memory_space<vmem>>, %arg19: memref<1x32xf32, #tpu.memory_space<vmem>>, %arg20: memref<1x32xf32, #tpu.memory_space<vmem>>, %arg21: memref<1x8x32xf32, #tpu.memory_space<vmem>>) attributes {dimension_semantics = [#tpu.dimension_semantics<parallel>], iteration_bounds = array<i64: 4>, scalar_prefetch = 0 : i64, scratch_operands = 0 : i64, tpu.core_type = #tpu.core_type<tc>, window_params = [{transform_indices = @transform_0, window_bounds = array<i64: 1, 8, 16>}, {transform_indices = @transform_1, window_bounds = array<i64: 1, 8, 8>}, {pipeline_mode = #tpu.pipeline_mode<synchronous>, transform_indices = @transform_2, window_bounds = array<i64: 16, 32>}, {pipeline_mode = #tpu.pipeline_mode<synchronous>, transform_indices = @transform_3, window_bounds = array<i64: 1, 32>}, {pipeline_mode = #tpu.pipeline_mode<synchronous>, transform_indices = @transform_4, window_bounds = array<i64: 32, 32>}, {pipeline_mode = #tpu.pipeline_mode<synchronous>, transform_indices = @transform_5, window_bounds = array<i64: 1, 32>}, {pipeline_mode = #tpu.pipeline_mode<synchronous>, transform_indices = @transform_6, window_bounds = array<i64: 32, 32>}, {pipeline_mode = #tpu.pipeline_mode<synchronous>, transform_indices = @transform_7, window_bounds = array<i64: 1, 32>}, {pipeline_mode = #tpu.pipeline_mode<synchronous>, transform_indices = @transform_8, window_bounds = array<i64: 32, 32>}, {pipeline_mode = #tpu.pipeline_mode<synchronous>, transform_indices = @transform_9, window_bounds = array<i64: 1, 32>}, {pipeline_mode = #tpu.pipeline_mode<synchronous>, transform_indices = @transform_10, window_bounds = array<i64: 32, 32>}, {pipeline_mode = #tpu.pipeline_mode<synchronous>, transform_indices = @transform_11, window_bounds = array<i64: 1, 32>}, {pipeline_mode = #tpu.pipeline_mode<synchronous>, transform_indices = @transform_12, window_bounds = array<i64: 32, 64>}, {pipeline_mode = #tpu.pipeline_mode<synchronous>, transform_indices = @transform_13, window_bounds = array<i64: 1, 64>}, {pipeline_mode = #tpu.pipeline_mode<synchronous>, transform_indices = @transform_14, window_bounds = array<i64: 64, 32>}, {pipeline_mode = #tpu.pipeline_mode<synchronous>, transform_indices = @transform_15, window_bounds = array<i64: 1, 32>}, {pipeline_mode = #tpu.pipeline_mode<synchronous>, transform_indices = @transform_16, window_bounds = array<i64: 1, 32>}, {pipeline_mode = #tpu.pipeline_mode<synchronous>, transform_indices = @transform_17, window_bounds = array<i64: 1, 32>}, {pipeline_mode = #tpu.pipeline_mode<synchronous>, transform_indices = @transform_18, window_bounds = array<i64: 1, 32>}, {pipeline_mode = #tpu.pipeline_mode<synchronous>, transform_indices = @transform_19, window_bounds = array<i64: 1, 32>}, {transform_indices = @transform_20, window_bounds = array<i64: 1, 8, 32>}]} {
    %c0 = arith.constant 0 : index
    %c0_0 = arith.constant 0 : index
    %c0_1 = arith.constant 0 : index
    %0 = vector.load %arg1[%c0, %c0_0, %c0_1] : memref<1x8x16xf32, #tpu.memory_space<vmem>>, vector<1x8x16xf32>
    %1 = vector.shape_cast %0 : vector<1x8x16xf32> to vector<8x16xf32>
    %c0_2 = arith.constant 0 : index
    %c0_3 = arith.constant 0 : index
    %c0_4 = arith.constant 0 : index
    %2 = vector.load %arg2[%c0_2, %c0_3, %c0_4] : memref<1x8x8xf32, #tpu.memory_space<vmem>>, vector<1x8x8xf32>
    %3 = vector.shape_cast %2 : vector<1x8x8xf32> to vector<8x8xf32>
    %c0_5 = arith.constant 0 : index
    %c0_6 = arith.constant 0 : index
    %4 = vector.load %arg3[%c0_5, %c0_6] : memref<16x32xbf16, #tpu.memory_space<vmem>>, vector<16x32xbf16>
    %5 = arith.truncf %1 : vector<8x16xf32> to vector<8x16xbf16>
    %cst = arith.constant dense<0.000000e+00> : vector<8x32xf32>
    %6 = tpu.matmul %5, %4, %cst {dimension_numbers = #tpu.dot_dimension_numbers<[1], [0], [0], [1], [0, 0, 1, 1], [], []>} : vector<8x16xbf16>, vector<16x32xbf16>, vector<8x32xf32> -> vector<8x32xf32>
    %c0_7 = arith.constant 0 : index
    %c0_8 = arith.constant 0 : index
    %7 = vector.load %arg4[%c0_7, %c0_8] : memref<1x32xf32, #tpu.memory_space<vmem>>, vector<1x32xf32>
    %8 = vector.broadcast %7 : vector<1x32xf32> to vector<8x32xf32>
    %9 = arith.addf %6, %8 : vector<8x32xf32>
    %c0_9 = arith.constant 0 : index
    %c0_10 = arith.constant 0 : index
    %10 = vector.load %arg5[%c0_9, %c0_10] : memref<32x32xbf16, #tpu.memory_space<vmem>>, vector<32x32xbf16>
    %11 = arith.truncf %9 : vector<8x32xf32> to vector<8x32xbf16>
    %cst_11 = arith.constant dense<0.000000e+00> : vector<8x32xf32>
    %12 = tpu.matmul %11, %10, %cst_11 {dimension_numbers = #tpu.dot_dimension_numbers<[1], [0], [0], [1], [0, 0, 1, 1], [], []>} : vector<8x32xbf16>, vector<32x32xbf16>, vector<8x32xf32> -> vector<8x32xf32>
    %c0_12 = arith.constant 0 : index
    %c0_13 = arith.constant 0 : index
    %13 = vector.load %arg6[%c0_12, %c0_13] : memref<1x32xf32, #tpu.memory_space<vmem>>, vector<1x32xf32>
    %14 = vector.broadcast %13 : vector<1x32xf32> to vector<8x32xf32>
    %15 = arith.addf %12, %14 : vector<8x32xf32>
    %c0_14 = arith.constant 0 : index
    %c0_15 = arith.constant 0 : index
    %16 = vector.load %arg7[%c0_14, %c0_15] : memref<32x32xbf16, #tpu.memory_space<vmem>>, vector<32x32xbf16>
    %17 = arith.truncf %9 : vector<8x32xf32> to vector<8x32xbf16>
    %cst_16 = arith.constant dense<0.000000e+00> : vector<8x32xf32>
    %18 = tpu.matmul %17, %16, %cst_16 {dimension_numbers = #tpu.dot_dimension_numbers<[1], [0], [0], [1], [0, 0, 1, 1], [], []>} : vector<8x32xbf16>, vector<32x32xbf16>, vector<8x32xf32> -> vector<8x32xf32>
    %c0_17 = arith.constant 0 : index
    %c0_18 = arith.constant 0 : index
    %19 = vector.load %arg8[%c0_17, %c0_18] : memref<1x32xf32, #tpu.memory_space<vmem>>, vector<1x32xf32>
    %20 = vector.broadcast %19 : vector<1x32xf32> to vector<8x32xf32>
    %21 = arith.addf %18, %20 : vector<8x32xf32>
    %c0_19 = arith.constant 0 : index
    %c0_20 = arith.constant 0 : index
    %22 = vector.load %arg9[%c0_19, %c0_20] : memref<32x32xbf16, #tpu.memory_space<vmem>>, vector<32x32xbf16>
    %23 = arith.truncf %9 : vector<8x32xf32> to vector<8x32xbf16>
    %cst_21 = arith.constant dense<0.000000e+00> : vector<8x32xf32>
    %24 = tpu.matmul %23, %22, %cst_21 {dimension_numbers = #tpu.dot_dimension_numbers<[1], [0], [0], [1], [0, 0, 1, 1], [], []>} : vector<8x32xbf16>, vector<32x32xbf16>, vector<8x32xf32> -> vector<8x32xf32>
    %c0_22 = arith.constant 0 : index
    %c0_23 = arith.constant 0 : index
    %25 = vector.load %arg10[%c0_22, %c0_23] : memref<1x32xf32, #tpu.memory_space<vmem>>, vector<1x32xf32>
    %26 = vector.broadcast %25 : vector<1x32xf32> to vector<8x32xf32>
    %27 = arith.addf %24, %26 : vector<8x32xf32>
    %28 = arith.truncf %15 : vector<8x32xf32> to vector<8x32xbf16>
    %29 = arith.truncf %21 : vector<8x32xf32> to vector<8x32xbf16>
    %30 = arith.truncf %27 : vector<8x32xf32> to vector<8x32xbf16>
    %cst_24 = arith.constant 0.000000e+00 : f32
    %31 = vector.broadcast %cst_24 : f32 to vector<8x8xf32>
    %32 = arith.cmpf oeq, %3, %31 : vector<8x8xf32>
    %33 = vector.extract_strided_slice %28 {offsets = [0, 0], sizes = [8, 8], strides = [1, 1]} : vector<8x32xbf16> to vector<8x8xbf16>
    %34 = vector.extract_strided_slice %29 {offsets = [0, 0], sizes = [8, 8], strides = [1, 1]} : vector<8x32xbf16> to vector<8x8xbf16>
    %cst_25 = arith.constant dense<0.000000e+00> : vector<8x8xf32>
    %35 = tpu.matmul %33, %34, %cst_25 {dimension_numbers = #tpu.dot_dimension_numbers<[1], [1], [0], [0], [0, 0, 1, 0], [], []>} : vector<8x8xbf16>, vector<8x8xbf16>, vector<8x8xf32> -> vector<8x8xf32>
    %cst_26 = arith.constant 0.353553385 : f32
    %36 = vector.broadcast %cst_26 : f32 to vector<8x8xf32>
    %37 = arith.mulf %35, %36 : vector<8x8xf32>
    %cst_27 = arith.constant -1.000000e+09 : f32
    %38 = vector.broadcast %cst_27 : f32 to vector<8x8xf32>
    %39 = arith.select %32, %38, %37 : vector<8x8xi1>, vector<8x8xf32>
    %40 = vector.extract_strided_slice %28 {offsets = [0, 8], sizes = [8, 8], strides = [1, 1]} : vector<8x32xbf16> to vector<8x8xbf16>
    %41 = vector.extract_strided_slice %29 {offsets = [0, 8], sizes = [8, 8], strides = [1, 1]} : vector<8x32xbf16> to vector<8x8xbf16>
    %cst_28 = arith.constant dense<0.000000e+00> : vector<8x8xf32>
    %42 = tpu.matmul %40, %41, %cst_28 {dimension_numbers = #tpu.dot_dimension_numbers<[1], [1], [0], [0], [0, 0, 1, 0], [], []>} : vector<8x8xbf16>, vector<8x8xbf16>, vector<8x8xf32> -> vector<8x8xf32>
    %cst_29 = arith.constant 0.353553385 : f32
    %43 = vector.broadcast %cst_29 : f32 to vector<8x8xf32>
    %44 = arith.mulf %42, %43 : vector<8x8xf32>
    %cst_30 = arith.constant -1.000000e+09 : f32
    %45 = vector.broadcast %cst_30 : f32 to vector<8x8xf32>
    %46 = arith.select %32, %45, %44 : vector<8x8xi1>, vector<8x8xf32>
    %47 = vector.extract_strided_slice %28 {offsets = [0, 16], sizes = [8, 8], strides = [1, 1]} : vector<8x32xbf16> to vector<8x8xbf16>
    %48 = vector.extract_strided_slice %29 {offsets = [0, 16], sizes = [8, 8], strides = [1, 1]} : vector<8x32xbf16> to vector<8x8xbf16>
    %cst_31 = arith.constant dense<0.000000e+00> : vector<8x8xf32>
    %49 = tpu.matmul %47, %48, %cst_31 {dimension_numbers = #tpu.dot_dimension_numbers<[1], [1], [0], [0], [0, 0, 1, 0], [], []>} : vector<8x8xbf16>, vector<8x8xbf16>, vector<8x8xf32> -> vector<8x8xf32>
    %cst_32 = arith.constant 0.353553385 : f32
    %50 = vector.broadcast %cst_32 : f32 to vector<8x8xf32>
    %51 = arith.mulf %49, %50 : vector<8x8xf32>
    %cst_33 = arith.constant -1.000000e+09 : f32
    %52 = vector.broadcast %cst_33 : f32 to vector<8x8xf32>
    %53 = arith.select %32, %52, %51 : vector<8x8xi1>, vector<8x8xf32>
    %54 = vector.extract_strided_slice %28 {offsets = [0, 24], sizes = [8, 8], strides = [1, 1]} : vector<8x32xbf16> to vector<8x8xbf16>
    %55 = vector.extract_strided_slice %29 {offsets = [0, 24], sizes = [8, 8], strides = [1, 1]} : vector<8x32xbf16> to vector<8x8xbf16>
    %cst_34 = arith.constant dense<0.000000e+00> : vector<8x8xf32>
    %56 = tpu.matmul %54, %55, %cst_34 {dimension_numbers = #tpu.dot_dimension_numbers<[1], [1], [0], [0], [0, 0, 1, 0], [], []>} : vector<8x8xbf16>, vector<8x8xbf16>, vector<8x8xf32> -> vector<8x8xf32>
    %cst_35 = arith.constant 0.353553385 : f32
    %57 = vector.broadcast %cst_35 : f32 to vector<8x8xf32>
    %58 = arith.mulf %56, %57 : vector<8x8xf32>
    %cst_36 = arith.constant -1.000000e+09 : f32
    %59 = vector.broadcast %cst_36 : f32 to vector<8x8xf32>
    %60 = arith.select %32, %59, %58 : vector<8x8xi1>, vector<8x8xf32>
    %61 = arith.maximumf %39, %46 : vector<8x8xf32>
    %62 = arith.maximumf %61, %53 : vector<8x8xf32>
    %63 = arith.maximumf %62, %60 : vector<8x8xf32>
    %64 = arith.subf %39, %63 : vector<8x8xf32>
    %65 = math.exp %64 : vector<8x8xf32>
    %66 = arith.subf %46, %63 : vector<8x8xf32>
    %67 = math.exp %66 : vector<8x8xf32>
    %68 = arith.subf %53, %63 : vector<8x8xf32>
    %69 = math.exp %68 : vector<8x8xf32>
    %70 = arith.subf %60, %63 : vector<8x8xf32>
    %71 = math.exp %70 : vector<8x8xf32>
    %72 = arith.addf %65, %67 : vector<8x8xf32>
    %73 = arith.addf %72, %69 : vector<8x8xf32>
    %74 = arith.addf %73, %71 : vector<8x8xf32>
    %75 = tpu.reciprocal %74 {approx = true} : vector<8x8xf32> -> vector<8x8xf32>
    %cst_37 = arith.constant 0.000000e+00 : f32
    %76 = vector.broadcast %cst_37 : f32 to vector<8x32xf32>
    %77 = arith.mulf %65, %75 : vector<8x8xf32>
    %78 = arith.truncf %77 : vector<8x8xf32> to vector<8x8xbf16>
    %79 = vector.extract_strided_slice %30 {offsets = [0, 0], sizes = [8, 8], strides = [1, 1]} : vector<8x32xbf16> to vector<8x8xbf16>
    %cst_38 = arith.constant dense<0.000000e+00> : vector<8x8xf32>
    %80 = tpu.matmul %78, %79, %cst_38 {dimension_numbers = #tpu.dot_dimension_numbers<[1], [0], [0], [1], [0, 0, 1, 1], [], []>} : vector<8x8xbf16>, vector<8x8xbf16>, vector<8x8xf32> -> vector<8x8xf32>
    %81 = arith.truncf %80 : vector<8x8xf32> to vector<8x8xbf16>
    %c0_39 = arith.constant 0 : index
    %c0_40 = arith.constant 0 : index
    %82 = vector.load %arg11[%c0_39, %c0_40] : memref<32x32xbf16, #tpu.memory_space<vmem>>, vector<8x32xbf16>
    %cst_41 = arith.constant dense<0.000000e+00> : vector<8x32xf32>
    %83 = tpu.matmul %81, %82, %cst_41 {dimension_numbers = #tpu.dot_dimension_numbers<[1], [0], [0], [1], [0, 0, 1, 1], [], []>} : vector<8x8xbf16>, vector<8x32xbf16>, vector<8x32xf32> -> vector<8x32xf32>
    %84 = arith.addf %76, %83 : vector<8x32xf32>
    %85 = arith.mulf %67, %75 : vector<8x8xf32>
    %86 = arith.truncf %85 : vector<8x8xf32> to vector<8x8xbf16>
    %87 = vector.extract_strided_slice %30 {offsets = [0, 8], sizes = [8, 8], strides = [1, 1]} : vector<8x32xbf16> to vector<8x8xbf16>
    %cst_42 = arith.constant dense<0.000000e+00> : vector<8x8xf32>
    %88 = tpu.matmul %86, %87, %cst_42 {dimension_numbers = #tpu.dot_dimension_numbers<[1], [0], [0], [1], [0, 0, 1, 1], [], []>} : vector<8x8xbf16>, vector<8x8xbf16>, vector<8x8xf32> -> vector<8x8xf32>
    %89 = arith.truncf %88 : vector<8x8xf32> to vector<8x8xbf16>
    %c8 = arith.constant 8 : index
    %c0_43 = arith.constant 0 : index
    %90 = vector.load %arg11[%c8, %c0_43] : memref<32x32xbf16, #tpu.memory_space<vmem>>, vector<8x32xbf16>
    %cst_44 = arith.constant dense<0.000000e+00> : vector<8x32xf32>
    %91 = tpu.matmul %89, %90, %cst_44 {dimension_numbers = #tpu.dot_dimension_numbers<[1], [0], [0], [1], [0, 0, 1, 1], [], []>} : vector<8x8xbf16>, vector<8x32xbf16>, vector<8x32xf32> -> vector<8x32xf32>
    %92 = arith.addf %84, %91 : vector<8x32xf32>
    %93 = arith.mulf %69, %75 : vector<8x8xf32>
    %94 = arith.truncf %93 : vector<8x8xf32> to vector<8x8xbf16>
    %95 = vector.extract_strided_slice %30 {offsets = [0, 16], sizes = [8, 8], strides = [1, 1]} : vector<8x32xbf16> to vector<8x8xbf16>
    %cst_45 = arith.constant dense<0.000000e+00> : vector<8x8xf32>
    %96 = tpu.matmul %94, %95, %cst_45 {dimension_numbers = #tpu.dot_dimension_numbers<[1], [0], [0], [1], [0, 0, 1, 1], [], []>} : vector<8x8xbf16>, vector<8x8xbf16>, vector<8x8xf32> -> vector<8x8xf32>
    %97 = arith.truncf %96 : vector<8x8xf32> to vector<8x8xbf16>
    %c16 = arith.constant 16 : index
    %c0_46 = arith.constant 0 : index
    %98 = vector.load %arg11[%c16, %c0_46] : memref<32x32xbf16, #tpu.memory_space<vmem>>, vector<8x32xbf16>
    %cst_47 = arith.constant dense<0.000000e+00> : vector<8x32xf32>
    %99 = tpu.matmul %97, %98, %cst_47 {dimension_numbers = #tpu.dot_dimension_numbers<[1], [0], [0], [1], [0, 0, 1, 1], [], []>} : vector<8x8xbf16>, vector<8x32xbf16>, vector<8x32xf32> -> vector<8x32xf32>
    %100 = arith.addf %92, %99 : vector<8x32xf32>
    %101 = arith.mulf %71, %75 : vector<8x8xf32>
    %102 = arith.truncf %101 : vector<8x8xf32> to vector<8x8xbf16>
    %103 = vector.extract_strided_slice %30 {offsets = [0, 24], sizes = [8, 8], strides = [1, 1]} : vector<8x32xbf16> to vector<8x8xbf16>
    %cst_48 = arith.constant dense<0.000000e+00> : vector<8x8xf32>
    %104 = tpu.matmul %102, %103, %cst_48 {dimension_numbers = #tpu.dot_dimension_numbers<[1], [0], [0], [1], [0, 0, 1, 1], [], []>} : vector<8x8xbf16>, vector<8x8xbf16>, vector<8x8xf32> -> vector<8x8xf32>
    %105 = arith.truncf %104 : vector<8x8xf32> to vector<8x8xbf16>
    %c24 = arith.constant 24 : index
    %c0_49 = arith.constant 0 : index
    %106 = vector.load %arg11[%c24, %c0_49] : memref<32x32xbf16, #tpu.memory_space<vmem>>, vector<8x32xbf16>
    %cst_50 = arith.constant dense<0.000000e+00> : vector<8x32xf32>
    %107 = tpu.matmul %105, %106, %cst_50 {dimension_numbers = #tpu.dot_dimension_numbers<[1], [0], [0], [1], [0, 0, 1, 1], [], []>} : vector<8x8xbf16>, vector<8x32xbf16>, vector<8x32xf32> -> vector<8x32xf32>
    %108 = arith.addf %100, %107 : vector<8x32xf32>
    %c0_51 = arith.constant 0 : index
    %c0_52 = arith.constant 0 : index
    %109 = vector.load %arg12[%c0_51, %c0_52] : memref<1x32xf32, #tpu.memory_space<vmem>>, vector<1x32xf32>
    %110 = vector.broadcast %109 : vector<1x32xf32> to vector<8x32xf32>
    %111 = arith.addf %108, %110 : vector<8x32xf32>
    %112 = arith.addf %9, %111 : vector<8x32xf32>
    %cst_53 = arith.constant dense<0.000000e+00> : vector<8xf32>
    %113 = vector.multi_reduction <add>, %112, %cst_53 [1] : vector<8x32xf32> to vector<8xf32>
    %114 = vector.shape_cast %113 : vector<8xf32> to vector<8x1xf32>
    %cst_54 = arith.constant 3.200000e+01 : f32
    %115 = vector.broadcast %cst_54 : f32 to vector<8x1xf32>
    %116 = arith.divf %114, %115 : vector<8x1xf32>
    %117 = vector.broadcast %116 : vector<8x1xf32> to vector<8x32xf32>
    %118 = arith.subf %112, %117 : vector<8x32xf32>
    %119 = arith.mulf %118, %118 : vector<8x32xf32>
    %cst_55 = arith.constant dense<0.000000e+00> : vector<8xf32>
    %120 = vector.multi_reduction <add>, %119, %cst_55 [1] : vector<8x32xf32> to vector<8xf32>
    %121 = vector.shape_cast %120 : vector<8xf32> to vector<8x1xf32>
    %cst_56 = arith.constant 3.200000e+01 : f32
    %122 = vector.broadcast %cst_56 : f32 to vector<8x1xf32>
    %123 = arith.divf %121, %122 : vector<8x1xf32>
    %124 = vector.broadcast %116 : vector<8x1xf32> to vector<8x32xf32>
    %125 = arith.subf %112, %124 : vector<8x32xf32>
    %cst_57 = arith.constant 9.99999974E-6 : f32
    %126 = vector.broadcast %cst_57 : f32 to vector<8x1xf32>
    %127 = arith.addf %123, %126 : vector<8x1xf32>
    %128 = math.rsqrt %127 : vector<8x1xf32>
    %129 = vector.broadcast %128 : vector<8x1xf32> to vector<8x32xf32>
    %130 = arith.mulf %125, %129 : vector<8x32xf32>
    %c0_58 = arith.constant 0 : index
    %c0_59 = arith.constant 0 : index
    %131 = vector.load %arg17[%c0_58, %c0_59] : memref<1x32xf32, #tpu.memory_space<vmem>>, vector<1x32xf32>
    %132 = vector.broadcast %131 : vector<1x32xf32> to vector<8x32xf32>
    %133 = arith.mulf %130, %132 : vector<8x32xf32>
    %c0_60 = arith.constant 0 : index
    %c0_61 = arith.constant 0 : index
    %134 = vector.load %arg18[%c0_60, %c0_61] : memref<1x32xf32, #tpu.memory_space<vmem>>, vector<1x32xf32>
    %135 = vector.broadcast %134 : vector<1x32xf32> to vector<8x32xf32>
    %136 = arith.addf %133, %135 : vector<8x32xf32>
    %c0_62 = arith.constant 0 : index
    %c0_63 = arith.constant 0 : index
    %137 = vector.load %arg13[%c0_62, %c0_63] : memref<32x64xbf16, #tpu.memory_space<vmem>>, vector<32x64xbf16>
    %138 = arith.truncf %136 : vector<8x32xf32> to vector<8x32xbf16>
    %cst_64 = arith.constant dense<0.000000e+00> : vector<8x64xf32>
    %139 = tpu.matmul %138, %137, %cst_64 {dimension_numbers = #tpu.dot_dimension_numbers<[1], [0], [0], [1], [0, 0, 1, 1], [], []>} : vector<8x32xbf16>, vector<32x64xbf16>, vector<8x64xf32> -> vector<8x64xf32>
    %c0_65 = arith.constant 0 : index
    %c0_66 = arith.constant 0 : index
    %140 = vector.load %arg14[%c0_65, %c0_66] : memref<1x64xf32, #tpu.memory_space<vmem>>, vector<1x64xf32>
    %141 = vector.broadcast %140 : vector<1x64xf32> to vector<8x64xf32>
    %142 = arith.addf %139, %141 : vector<8x64xf32>
    %cst_67 = arith.constant 0.000000e+00 : f32
    %143 = vector.broadcast %cst_67 : f32 to vector<8x64xf32>
    %144 = arith.maximumf %142, %143 : vector<8x64xf32>
    %c0_68 = arith.constant 0 : index
    %c0_69 = arith.constant 0 : index
    %145 = vector.load %arg15[%c0_68, %c0_69] : memref<64x32xbf16, #tpu.memory_space<vmem>>, vector<64x32xbf16>
    %146 = arith.truncf %144 : vector<8x64xf32> to vector<8x64xbf16>
    %cst_70 = arith.constant dense<0.000000e+00> : vector<8x32xf32>
    %147 = tpu.matmul %146, %145, %cst_70 {dimension_numbers = #tpu.dot_dimension_numbers<[1], [0], [0], [1], [0, 0, 1, 1], [], []>} : vector<8x64xbf16>, vector<64x32xbf16>, vector<8x32xf32> -> vector<8x32xf32>
    %c0_71 = arith.constant 0 : index
    %c0_72 = arith.constant 0 : index
    %148 = vector.load %arg16[%c0_71, %c0_72] : memref<1x32xf32, #tpu.memory_space<vmem>>, vector<1x32xf32>
    %149 = vector.broadcast %148 : vector<1x32xf32> to vector<8x32xf32>
    %150 = arith.addf %147, %149 : vector<8x32xf32>
    %151 = arith.addf %136, %150 : vector<8x32xf32>
    %cst_73 = arith.constant dense<0.000000e+00> : vector<8xf32>
    %152 = vector.multi_reduction <add>, %151, %cst_73 [1] : vector<8x32xf32> to vector<8xf32>
    %153 = vector.shape_cast %152 : vector<8xf32> to vector<8x1xf32>
    %cst_74 = arith.constant 3.200000e+01 : f32
    %154 = vector.broadcast %cst_74 : f32 to vector<8x1xf32>
    %155 = arith.divf %153, %154 : vector<8x1xf32>
    %156 = vector.broadcast %155 : vector<8x1xf32> to vector<8x32xf32>
    %157 = arith.subf %151, %156 : vector<8x32xf32>
    %158 = arith.mulf %157, %157 : vector<8x32xf32>
    %cst_75 = arith.constant dense<0.000000e+00> : vector<8xf32>
    %159 = vector.multi_reduction <add>, %158, %cst_75 [1] : vector<8x32xf32> to vector<8xf32>
    %160 = vector.shape_cast %159 : vector<8xf32> to vector<8x1xf32>
    %cst_76 = arith.constant 3.200000e+01 : f32
    %161 = vector.broadcast %cst_76 : f32 to vector<8x1xf32>
    %162 = arith.divf %160, %161 : vector<8x1xf32>
    %163 = vector.broadcast %155 : vector<8x1xf32> to vector<8x32xf32>
    %164 = arith.subf %151, %163 : vector<8x32xf32>
    %cst_77 = arith.constant 9.99999974E-6 : f32
    %165 = vector.broadcast %cst_77 : f32 to vector<8x1xf32>
    %166 = arith.addf %162, %165 : vector<8x1xf32>
    %167 = math.rsqrt %166 : vector<8x1xf32>
    %168 = vector.broadcast %167 : vector<8x1xf32> to vector<8x32xf32>
    %169 = arith.mulf %164, %168 : vector<8x32xf32>
    %c0_78 = arith.constant 0 : index
    %c0_79 = arith.constant 0 : index
    %170 = vector.load %arg19[%c0_78, %c0_79] : memref<1x32xf32, #tpu.memory_space<vmem>>, vector<1x32xf32>
    %171 = vector.broadcast %170 : vector<1x32xf32> to vector<8x32xf32>
    %172 = arith.mulf %169, %171 : vector<8x32xf32>
    %c0_80 = arith.constant 0 : index
    %c0_81 = arith.constant 0 : index
    %173 = vector.load %arg20[%c0_80, %c0_81] : memref<1x32xf32, #tpu.memory_space<vmem>>, vector<1x32xf32>
    %174 = vector.broadcast %173 : vector<1x32xf32> to vector<8x32xf32>
    %175 = arith.addf %172, %174 : vector<8x32xf32>
    %c0_82 = arith.constant 0 : index
    %c0_83 = arith.constant 0 : index
    %c0_84 = arith.constant 0 : index
    %176 = vector.load %arg21[%c0_82, %c0_83, %c0_84] : memref<1x8x32xf32, #tpu.memory_space<vmem>>, vector<1x8x32xf32>
    %177 = vector.shape_cast %176 : vector<1x8x32xf32> to vector<8x32xf32>
    %178 = vector.shape_cast %175 : vector<8x32xf32> to vector<1x8x32xf32>
    tpu.vector_store %arg21[%c0_82, %c0_83, %c0_84], %178 {strides = array<i32>} : memref<1x8x32xf32, #tpu.memory_space<vmem>>, vector<1x8x32xf32>,
    return
  }
  func.func @transform_0(%arg0: i32) -> (i32, i32, i32) {
    %c0_i32 = arith.constant 0 : i32
    %c0_i32_0 = arith.constant 0 : i32
    %c0_i32_1 = arith.constant 0 : i32
    return %arg0, %c0_i32, %c0_i32_0 : i32, i32, i32
  }
  func.func @transform_1(%arg0: i32) -> (i32, i32, i32) {
    %c0_i32 = arith.constant 0 : i32
    %c0_i32_0 = arith.constant 0 : i32
    %c0_i32_1 = arith.constant 0 : i32
    return %arg0, %c0_i32, %c0_i32_0 : i32, i32, i32
  }
  func.func @transform_2(%arg0: i32) -> (i32, i32) {
    %c0_i32 = arith.constant 0 : i32
    %c0_i32_0 = arith.constant 0 : i32
    %c0_i32_1 = arith.constant 0 : i32
    return %c0_i32, %c0_i32_0 : i32, i32
  }
  func.func @transform_3(%arg0: i32) -> (i32, i32) {
    %c0_i32 = arith.constant 0 : i32
    %c0_i32_0 = arith.constant 0 : i32
    %c0_i32_1 = arith.constant 0 : i32
    return %c0_i32, %c0_i32_0 : i32, i32
  }
  func.func @transform_4(%arg0: i32) -> (i32, i32) {
    %c0_i32 = arith.constant 0 : i32
    %c0_i32_0 = arith.constant 0 : i32
    %c0_i32_1 = arith.constant 0 : i32
    return %c0_i32, %c0_i32_0 : i32, i32
  }
  func.func @transform_5(%arg0: i32) -> (i32, i32) {
    %c0_i32 = arith.constant 0 : i32
    %c0_i32_0 = arith.constant 0 : i32
    %c0_i32_1 = arith.constant 0 : i32
    return %c0_i32, %c0_i32_0 : i32, i32
  }
  func.func @transform_6(%arg0: i32) -> (i32, i32) {
    %c0_i32 = arith.constant 0 : i32
    %c0_i32_0 = arith.constant 0 : i32
    %c0_i32_1 = arith.constant 0 : i32
    return %c0_i32, %c0_i32_0 : i32, i32
  }
  func.func @transform_7(%arg0: i32) -> (i32, i32) {
    %c0_i32 = arith.constant 0 : i32
    %c0_i32_0 = arith.constant 0 : i32
    %c0_i32_1 = arith.constant 0 : i32
    return %c0_i32, %c0_i32_0 : i32, i32
  }
  func.func @transform_8(%arg0: i32) -> (i32, i32) {
    %c0_i32 = arith.constant 0 : i32
    %c0_i32_0 = arith.constant 0 : i32
    %c0_i32_1 = arith.constant 0 : i32
    return %c0_i32, %c0_i32_0 : i32, i32
  }
  func.func @transform_9(%arg0: i32) -> (i32, i32) {
    %c0_i32 = arith.constant 0 : i32
    %c0_i32_0 = arith.constant 0 : i32
    %c0_i32_1 = arith.constant 0 : i32
    return %c0_i32, %c0_i32_0 : i32, i32
  }
  func.func @transform_10(%arg0: i32) -> (i32, i32) {
    %c0_i32 = arith.constant 0 : i32
    %c0_i32_0 = arith.constant 0 : i32
    %c0_i32_1 = arith.constant 0 : i32
    return %c0_i32, %c0_i32_0 : i32, i32
  }
  func.func @transform_11(%arg0: i32) -> (i32, i32) {
    %c0_i32 = arith.constant 0 : i32
    %c0_i32_0 = arith.constant 0 : i32
    %c0_i32_1 = arith.constant 0 : i32
    return %c0_i32, %c0_i32_0 : i32, i32
  }
  func.func @transform_12(%arg0: i32) -> (i32, i32) {
    %c0_i32 = arith.constant 0 : i32
    %c0_i32_0 = arith.constant 0 : i32
    %c0_i32_1 = arith.constant 0 : i32
    return %c0_i32, %c0_i32_0 : i32, i32
  }
  func.func @transform_13(%arg0: i32) -> (i32, i32) {
    %c0_i32 = arith.constant 0 : i32
    %c0_i32_0 = arith.constant 0 : i32
    %c0_i32_1 = arith.constant 0 : i32
    return %c0_i32, %c0_i32_0 : i32, i32
  }
  func.func @transform_14(%arg0: i32) -> (i32, i32) {
    %c0_i32 = arith.constant 0 : i32
    %c0_i32_0 = arith.constant 0 : i32
    %c0_i32_1 = arith.constant 0 : i32
    return %c0_i32, %c0_i32_0 : i32, i32
  }
  func.func @transform_15(%arg0: i32) -> (i32, i32) {
    %c0_i32 = arith.constant 0 : i32
    %c0_i32_0 = arith.constant 0 : i32
    %c0_i32_1 = arith.constant 0 : i32
    return %c0_i32, %c0_i32_0 : i32, i32
  }
  func.func @transform_16(%arg0: i32) -> (i32, i32) {
    %c0_i32 = arith.constant 0 : i32
    %c0_i32_0 = arith.constant 0 : i32
    %c0_i32_1 = arith.constant 0 : i32
    return %c0_i32, %c0_i32_0 : i32, i32
  }
  func.func @transform_17(%arg0: i32) -> (i32, i32) {
    %c0_i32 = arith.constant 0 : i32
    %c0_i32_0 = arith.constant 0 : i32
    %c0_i32_1 = arith.constant 0 : i32
    return %c0_i32, %c0_i32_0 : i32, i32
  }
  func.func @transform_18(%arg0: i32) -> (i32, i32) {
    %c0_i32 = arith.constant 0 : i32
    %c0_i32_0 = arith.constant 0 : i32
    %c0_i32_1 = arith.constant 0 : i32
    return %c0_i32, %c0_i32_0 : i32, i32
  }
  func.func @transform_19(%arg0: i32) -> (i32, i32) {
    %c0_i32 = arith.constant 0 : i32
    %c0_i32_0 = arith.constant 0 : i32
    %c0_i32_1 = arith.constant 0 : i32
    return %c0_i32, %c0_i32_0 : i32, i32
  }
  func.func @transform_20(%arg0: i32) -> (i32, i32, i32) {
    %c0_i32 = arith.constant 0 : i32
    %c0_i32_0 = arith.constant 0 : i32
    %c0_i32_1 = arith.constant 0 : i32
    return %arg0, %c0_i32, %c0_i32_0 : i32, i32, i32
  }
}

</mosaic_0001>

<llo_original>
// kernel: tpu_custom_call.1
$region0: #{tpu_custom_call.1}
  #allocation0 [shape = 'u32[]', space=smem, size = 0x4, offset = 0x4, fixed_abs, tag = 'smem constant byte address 0x4 - core index']
  #allocation1 [shape = 'u32[144,128]{1,0:T(1,128)}', space=vmem, size = 0x12000, scoped, tag = 'internal scratch']
  %s0 = inlined_call_operand.vmem [shape: f32[4,8,16], index: 0, kind: input, shape index: {}]
  %s1 = inlined_call_operand.hbm [shape: f32[4,8,8], index: 1, kind: input, shape index: {}]
  %s2 = inlined_call_operand.hbm [shape: bf16[16,32], index: 2, kind: input, shape index: {}]
  %s3 = inlined_call_operand.hbm [shape: f32[1,32], index: 3, kind: input, shape index: {}]
  %s4 = inlined_call_operand.vmem [shape: bf16[32,32], index: 4, kind: input, shape index: {}]
  %s5 = inlined_call_operand.hbm [shape: f32[1,32], index: 5, kind: input, shape index: {}]
  %s6 = inlined_call_operand.hbm [shape: bf16[32,32], index: 6, kind: input, shape index: {}]
  %s7 = inlined_call_operand.hbm [shape: f32[1,32], index: 7, kind: input, shape index: {}]
  %s8 = inlined_call_operand.hbm [shape: bf16[32,32], index: 8, kind: input, shape index: {}]
  %s9 = inlined_call_operand.hbm [shape: f32[1,32], index: 9, kind: input, shape index: {}]
  %s10 = inlined_call_operand.vmem [shape: bf16[32,32], index: 10, kind: input, shape index: {}]
  %s11 = inlined_call_operand.vmem [shape: f32[1,32], index: 11, kind: input, shape index: {}]
  %s12 = inlined_call_operand.hbm [shape: bf16[32,64], index: 12, kind: input, shape index: {}]
  %s13 = inlined_call_operand.vmem [shape: f32[1,64], index: 13, kind: input, shape index: {}]
  %s14 = inlined_call_operand.vmem [shape: bf16[64,32], index: 14, kind: input, shape index: {}]
  %s15 = inlined_call_operand.vmem [shape: f32[1,32], index: 15, kind: input, shape index: {}]
  %s16 = inlined_call_operand.vmem [shape: f32[1,32], index: 16, kind: input, shape index: {}]
  %s17 = inlined_call_operand.vmem [shape: f32[1,32], index: 17, kind: input, shape index: {}]
  %s18 = inlined_call_operand.vmem [shape: f32[1,32], index: 18, kind: input, shape index: {}]
  %s19 = inlined_call_operand.vmem [shape: f32[1,32], index: 19, kind: input, shape index: {}]
  %s20 = inlined_call_operand.hbm [shape: f32[4,8,32], index: 20, kind: output, shape index: {}]
  %s21 = sld [smem:[#allocation0]]
  $region149: #{tpu_custom_call.1} parent=0
    _
  %s23 = ssub.s32 1, %s21
  %s24 = scalar_select 0, %s23, %s21
  $region1: #{tpu_custom_call.1} parent=0
    #allocation2 [shape = 'u8[8192]{0}', space=vmem, size = 0x2000, scoped, tag = 'input window, operand 1']
    #allocation3 [shape = 's32[2]{0}', space=sflag, size = 0x8, scoped, tag = 'scoped memory for tpu_custom_call.1']
    #allocation4 [shape = 's32[2]{0}', space=sflag, size = 0x8, scoped, tag = 'scoped memory for tpu_custom_call.1']
    #allocation5 [shape = 'u8[4096]{0}', space=vmem, size = 0x1000, scoped, tag = 'input window, operand 2, single buffered']
    #allocation6 [shape = 's32[1]{0}', space=sflag, size = 0x4, scoped, tag = 'scoped memory for tpu_custom_call.1']
    #allocation7 [shape = 'u8[512]{0}', space=vmem, size = 0x400, scoped, tag = 'input window, operand 3, single buffered']
    #allocation8 [shape = 'u8[512]{0}', space=vmem, size = 0x400, scoped, tag = 'input window, operand 5, single buffered']
    #allocation9 [shape = 's32[1]{0}', space=sflag, size = 0x4, scoped, tag = 'scoped memory for tpu_custom_call.1']
    #allocation10 [shape = 'u8[8192]{0}', space=vmem, size = 0x2000, scoped, tag = 'input window, operand 6, single buffered']
    #allocation11 [shape = 'u8[512]{0}', space=vmem, size = 0x400, scoped, tag = 'input window, operand 7, single buffered']
    #allocation12 [shape = 's32[1]{0}', space=sflag, size = 0x4, scoped, tag = 'scoped memory for tpu_custom_call.1']
    #allocation13 [shape = 'u8[8192]{0}', space=vmem, size = 0x2000, scoped, tag = 'input window, operand 8, single buffered']
    #allocation14 [shape = 'u8[512]{0}', space=vmem, size = 0x400, scoped, tag = 'input window, operand 9, single buffered']
    #allocation15 [shape = 's32[1]{0}', space=sflag, size = 0x4, scoped, tag = 'scoped memory for tpu_custom_call.1']
    #allocation16 [shape = 'u8[8192]{0}', space=vmem, size = 0x2000, scoped, tag = 'input window, operand 12, single buffered']
    #allocation17 [shape = 'u8[8192]{0}', space=vmem, size = 0x2000, scoped, tag = 'output window, operand 0']
    %25 = vsyncpa [#allocation3], 0
    %s26 = scalar_lea.sflag [#allocation3], 1
    %27 = vsyncpa %s26, 0
    %28 = vsyncpa [#allocation6], 0
    %29 = vsyncpa [#allocation9], 0
    %30 = vsyncpa [#allocation12], 0
    %31 = vsyncpa [#allocation15], 0
    %32 = vsyncpa [#allocation4], 0
    %s33 = scalar_lea.sflag [#allocation4], 1
    %34 = vsyncpa %s33, 0
    loop: start=0, step=1, limit=6
    $region2: #{tpu_custom_call.1} parent=1 // loop_pre_header
      _
    $region3: #{tpu_custom_call.1} parent=1 // loop_header
      %s36 = sphi 0, %s40
      %p37 = scmp.ge.s32.totalorder %s36, 6
      %s46 = sphi 0, %s48
      %s49 = sphi 0, %s46
      %s50 = sphi 0, %s49
      %s66 = sphi 0, %s50
      %s72 = sphi 0, %s74
      %s75 = sphi 0, %s72
      %s76 = sphi 0, %s75
      %s92 = sphi 0, %s76
      %s96 = sphi 0, %s96
      %s98 = sphi 0, %s96
      %s99 = sphi 0, %s98
      %s113 = sphi 0, %s99
      %s117 = sphi 0, %s117
      %s119 = sphi 0, %s117
      %s120 = sphi 0, %s119
      %s134 = sphi 0, %s120
      %s138 = sphi 0, %s138
      %s140 = sphi 0, %s138
      %s141 = sphi 0, %s140
      %s155 = sphi 0, %s141
      %s159 = sphi 0, %s159
      %s161 = sphi 0, %s159
      %s162 = sphi 0, %s161
      %s176 = sphi 0, %s162
      %s180 = sphi 0, %s180
      %s182 = sphi 0, %s180
      %s183 = sphi 0, %s182
      %s197 = sphi 0, %s183
      %s201 = sphi 0, %s201
      %s203 = sphi 0, %s201
      %s204 = sphi 0, %s203
      %s218 = sphi 0, %s204
      %s222 = sphi 0, %s222
      %s224 = sphi 0, %s222
      %s225 = sphi 0, %s224
      %s239 = sphi 0, %s225
      %s243 = sphi 0, %s243
      %s245 = sphi 0, %s243
      %s246 = sphi 0, %s245
      %s260 = sphi 0, %s246
      %s264 = sphi 0, %s264
      %s266 = sphi 0, %s264
      %s267 = sphi 0, %s266
      %s281 = sphi 0, %s267
      %s285 = sphi 0, %s285
      %s287 = sphi 0, %s285
      %s288 = sphi 0, %s287
      %s302 = sphi 0, %s288
      %s306 = sphi 0, %s306
      %s308 = sphi 0, %s306
      %s309 = sphi 0, %s308
      %s323 = sphi 0, %s309
      %s327 = sphi 0, %s327
      %s329 = sphi 0, %s327
      %s330 = sphi 0, %s329
      %s344 = sphi 0, %s330
      %s348 = sphi 0, %s348
      %s350 = sphi 0, %s348
      %s351 = sphi 0, %s350
      %s365 = sphi 0, %s351
      %s369 = sphi 0, %s369
      %s371 = sphi 0, %s369
      %s372 = sphi 0, %s371
      %s386 = sphi 0, %s372
      %s390 = sphi 0, %s390
      %s392 = sphi 0, %s390
      %s393 = sphi 0, %s392
      %s407 = sphi 0, %s393
      %s411 = sphi 0, %s411
      %s413 = sphi 0, %s411
      %s414 = sphi 0, %s413
      %s428 = sphi 0, %s414
      %s432 = sphi 0, %s432
      %s434 = sphi 0, %s432
      %s435 = sphi 0, %s434
      %s449 = sphi 0, %s435
      %s453 = sphi 0, %s453
      %s455 = sphi 0, %s453
      %s456 = sphi 0, %s455
      %s470 = sphi 0, %s456
      %s476 = sphi 0, %s478
      %s479 = sphi 0, %s476
      %s480 = sphi 0, %s479
      %s496 = sphi 0, %s480
    $region4: #{tpu_custom_call.1} parent=1 // loop_header_branch
      %39 = sbr.rel (%p37) target = $region8
    $region5: #{tpu_custom_call.1} parent=1 // loop_body
      %s41 = ssub.s32 %s36, 1
      %s42 = ssub.s32 %s36, 2
      %s43 = sadd.s32 %s36, 1
      %s44 = ssub.s32 %s36, %s43
      %p45 = scmp.eq.s32.totalorder %s44, 0
      %s47 = sadd.s32 %s46, 1
      %s48 = scalar_select %p45, %s46, %s47
      %p51 = pneg %p45
      %p52 = scmp.eq.s32.totalorder %s36, 3
      %p53 = por %p51, %p52
      %p54 = scmp.ne.s32.totalorder %s46, %s49
      %p55 = scmp.eq.s32.totalorder %s36, 0
      %p56 = por %p54, %p55
      %p57 = scmp.ne.s32.totalorder %s46, %s49
      %p58 = scmp.eq.s32.totalorder %s41, 3
      %p59 = por %p57, %p58
      %p60 = scmp.ne.s32.totalorder %s49, %s50
      %p61 = scmp.eq.s32.totalorder %s41, 0
      %p62 = por %p60, %p61
      %p63 = scmp.ne.s32.totalorder %s49, %s50
      %p64 = scmp.eq.s32.totalorder %s42, 3
      %p65 = por %p63, %p64
      %p67 = scmp.ne.s32.totalorder %s50, %s66
      %p68 = scmp.eq.s32.totalorder %s42, 0
      %p69 = por %p67, %p68
      %s70 = ssub.s32 %s36, %s43
      %p71 = scmp.eq.s32.totalorder %s70, 0
      %s73 = sadd.s32 %s72, 1
      %s74 = scalar_select %p71, %s72, %s73
      %p77 = pneg %p71
      %p78 = scmp.eq.s32.totalorder %s36, 3
      %p79 = por %p77, %p78
      %p80 = scmp.ne.s32.totalorder %s72, %s75
      %p81 = scmp.eq.s32.totalorder %s36, 0
      %p82 = por %p80, %p81
      %p83 = scmp.ne.s32.totalorder %s72, %s75
      %p84 = scmp.eq.s32.totalorder %s41, 3
      %p85 = por %p83, %p84
      %p86 = scmp.ne.s32.totalorder %s75, %s76
      %p87 = scmp.eq.s32.totalorder %s41, 0
      %p88 = por %p86, %p87
      %p89 = scmp.ne.s32.totalorder %s75, %s76
      %p90 = scmp.eq.s32.totalorder %s42, 3
      %p91 = por %p89, %p90
      %p93 = scmp.ne.s32.totalorder %s76, %s92
      %p94 = scmp.eq.s32.totalorder %s42, 0
      %p95 = por %p93, %p94
      %s97 = sadd.s32 %s96, 1
      %p100 = scmp.eq.s32.totalorder %s36, 3
      %p101 = scmp.ne.s32.totalorder %s96, %s98
      %p102 = scmp.eq.s32.totalorder %s36, 0
      %p103 = por %p101, %p102
      %p104 = scmp.ne.s32.totalorder %s96, %s98
      %p105 = scmp.eq.s32.totalorder %s41, 3
      %p106 = por %p104, %p105
      %p107 = scmp.ne.s32.totalorder %s98, %s99
      %p108 = scmp.eq.s32.totalorder %s41, 0
      %p109 = por %p107, %p108
      %p110 = scmp.ne.s32.totalorder %s98, %s99
      %p111 = scmp.eq.s32.totalorder %s42, 3
      %p112 = por %p110, %p111
      %p114 = scmp.ne.s32.totalorder %s99, %s113
      %p115 = scmp.eq.s32.totalorder %s42, 0
      %p116 = por %p114, %p115
      %s118 = sadd.s32 %s117, 1
      %p121 = scmp.eq.s32.totalorder %s36, 3
      %p122 = scmp.ne.s32.totalorder %s117, %s119
      %p123 = scmp.eq.s32.totalorder %s36, 0
      %p124 = por %p122, %p123
      %p125 = scmp.ne.s32.totalorder %s117, %s119
      %p126 = scmp.eq.s32.totalorder %s41, 3
      %p127 = por %p125, %p126
      %p128 = scmp.ne.s32.totalorder %s119, %s120
      %p129 = scmp.eq.s32.totalorder %s41, 0
      %p130 = por %p128, %p129
      %p131 = scmp.ne.s32.totalorder %s119, %s120
      %p132 = scmp.eq.s32.totalorder %s42, 3
      %p133 = por %p131, %p132
      %p135 = scmp.ne.s32.totalorder %s120, %s134
      %p136 = scmp.eq.s32.totalorder %s42, 0
      %p137 = por %p135, %p136
      %s139 = sadd.s32 %s138, 1
      %p142 = scmp.eq.s32.totalorder %s36, 3
      %p143 = scmp.ne.s32.totalorder %s138, %s140
      %p144 = scmp.eq.s32.totalorder %s36, 0
      %p145 = por %p143, %p144
      %p146 = scmp.ne.s32.totalorder %s138, %s140
      %p147 = scmp.eq.s32.totalorder %s41, 3
      %p148 = por %p146, %p147
      %p149 = scmp.ne.s32.totalorder %s140, %s141
      %p150 = scmp.eq.s32.totalorder %s41, 0
      %p151 = por %p149, %p150
      %p152 = scmp.ne.s32.totalorder %s140, %s141
      %p153 = scmp.eq.s32.totalorder %s42, 3
      %p154 = por %p152, %p153
      %p156 = scmp.ne.s32.totalorder %s141, %s155
      %p157 = scmp.eq.s32.totalorder %s42, 0
      %p158 = por %p156, %p157
      %s160 = sadd.s32 %s159, 1
      %p163 = scmp.eq.s32.totalorder %s36, 3
      %p164 = scmp.ne.s32.totalorder %s159, %s161
      %p165 = scmp.eq.s32.totalorder %s36, 0
      %p166 = por %p164, %p165
      %p167 = scmp.ne.s32.totalorder %s159, %s161
      %p168 = scmp.eq.s32.totalorder %s41, 3
      %p169 = por %p167, %p168
      %p170 = scmp.ne.s32.totalorder %s161, %s162
      %p171 = scmp.eq.s32.totalorder %s41, 0
      %p172 = por %p170, %p171
      %p173 = scmp.ne.s32.totalorder %s161, %s162
      %p174 = scmp.eq.s32.totalorder %s42, 3
      %p175 = por %p173, %p174
      %p177 = scmp.ne.s32.totalorder %s162, %s176
      %p178 = scmp.eq.s32.totalorder %s42, 0
      %p179 = por %p177, %p178
      %s181 = sadd.s32 %s180, 1
      %p184 = scmp.eq.s32.totalorder %s36, 3
      %p185 = scmp.ne.s32.totalorder %s180, %s182
      %p186 = scmp.eq.s32.totalorder %s36, 0
      %p187 = por %p185, %p186
      %p188 = scmp.ne.s32.totalorder %s180, %s182
      %p189 = scmp.eq.s32.totalorder %s41, 3
      %p190 = por %p188, %p189
      %p191 = scmp.ne.s32.totalorder %s182, %s183
      %p192 = scmp.eq.s32.totalorder %s41, 0
      %p193 = por %p191, %p192
      %p194 = scmp.ne.s32.totalorder %s182, %s183
      %p195 = scmp.eq.s32.totalorder %s42, 3
      %p196 = por %p194, %p195
      %p198 = scmp.ne.s32.totalorder %s183, %s197
      %p199 = scmp.eq.s32.totalorder %s42, 0
      %p200 = por %p198, %p199
      %s202 = sadd.s32 %s201, 1
      %p205 = scmp.eq.s32.totalorder %s36, 3
      %p206 = scmp.ne.s32.totalorder %s201, %s203
      %p207 = scmp.eq.s32.totalorder %s36, 0
      %p208 = por %p206, %p207
      %p209 = scmp.ne.s32.totalorder %s201, %s203
      %p210 = scmp.eq.s32.totalorder %s41, 3
      %p211 = por %p209, %p210
      %p212 = scmp.ne.s32.totalorder %s203, %s204
      %p213 = scmp.eq.s32.totalorder %s41, 0
      %p214 = por %p212, %p213
      %p215 = scmp.ne.s32.totalorder %s203, %s204
      %p216 = scmp.eq.s32.totalorder %s42, 3
      %p217 = por %p215, %p216
      %p219 = scmp.ne.s32.totalorder %s204, %s218
      %p220 = scmp.eq.s32.totalorder %s42, 0
      %p221 = por %p219, %p220
      %s223 = sadd.s32 %s222, 1
      %p226 = scmp.eq.s32.totalorder %s36, 3
      %p227 = scmp.ne.s32.totalorder %s222, %s224
      %p228 = scmp.eq.s32.totalorder %s36, 0
      %p229 = por %p227, %p228
      %p230 = scmp.ne.s32.totalorder %s222, %s224
      %p231 = scmp.eq.s32.totalorder %s41, 3
      %p232 = por %p230, %p231
      %p233 = scmp.ne.s32.totalorder %s224, %s225
      %p234 = scmp.eq.s32.totalorder %s41, 0
      %p235 = por %p233, %p234
      %p236 = scmp.ne.s32.totalorder %s224, %s225
      %p237 = scmp.eq.s32.totalorder %s42, 3
      %p238 = por %p236, %p237
      %p240 = scmp.ne.s32.totalorder %s225, %s239
      %p241 = scmp.eq.s32.totalorder %s42, 0
      %p242 = por %p240, %p241
      %s244 = sadd.s32 %s243, 1
      %p247 = scmp.eq.s32.totalorder %s36, 3
      %p248 = scmp.ne.s32.totalorder %s243, %s245
      %p249 = scmp.eq.s32.totalorder %s36, 0
      %p250 = por %p248, %p249
      %p251 = scmp.ne.s32.totalorder %s243, %s245
      %p252 = scmp.eq.s32.totalorder %s41, 3
      %p253 = por %p251, %p252
      %p254 = scmp.ne.s32.totalorder %s245, %s246
      %p255 = scmp.eq.s32.totalorder %s41, 0
      %p256 = por %p254, %p255
      %p257 = scmp.ne.s32.totalorder %s245, %s246
      %p258 = scmp.eq.s32.totalorder %s42, 3
      %p259 = por %p257, %p258
      %p261 = scmp.ne.s32.totalorder %s246, %s260
      %p262 = scmp.eq.s32.totalorder %s42, 0
      %p263 = por %p261, %p262
      %s265 = sadd.s32 %s264, 1
      %p268 = scmp.eq.s32.totalorder %s36, 3
      %p269 = scmp.ne.s32.totalorder %s264, %s266
      %p270 = scmp.eq.s32.totalorder %s36, 0
      %p271 = por %p269, %p270
      %p272 = scmp.ne.s32.totalorder %s264, %s266
      %p273 = scmp.eq.s32.totalorder %s41, 3
      %p274 = por %p272, %p273
      %p275 = scmp.ne.s32.totalorder %s266, %s267
      %p276 = scmp.eq.s32.totalorder %s41, 0
      %p277 = por %p275, %p276
      %p278 = scmp.ne.s32.totalorder %s266, %s267
      %p279 = scmp.eq.s32.totalorder %s42, 3
      %p280 = por %p278, %p279
      %p282 = scmp.ne.s32.totalorder %s267, %s281
      %p283 = scmp.eq.s32.totalorder %s42, 0
      %p284 = por %p282, %p283
      %s286 = sadd.s32 %s285, 1
      %p289 = scmp.eq.s32.totalorder %s36, 3
      %p290 = scmp.ne.s32.totalorder %s285, %s287
      %p291 = scmp.eq.s32.totalorder %s36, 0
      %p292 = por %p290, %p291
      %p293 = scmp.ne.s32.totalorder %s285, %s287
      %p294 = scmp.eq.s32.totalorder %s41, 3
      %p295 = por %p293, %p294
      %p296 = scmp.ne.s32.totalorder %s287, %s288
      %p297 = scmp.eq.s32.totalorder %s41, 0
      %p298 = por %p296, %p297
      %p299 = scmp.ne.s32.totalorder %s287, %s288
      %p300 = scmp.eq.s32.totalorder %s42, 3
      %p301 = por %p299, %p300
      %p303 = scmp.ne.s32.totalorder %s288, %s302
      %p304 = scmp.eq.s32.totalorder %s42, 0
      %p305 = por %p303, %p304
      %s307 = sadd.s32 %s306, 1
      %p310 = scmp.eq.s32.totalorder %s36, 3
      %p311 = scmp.ne.s32.totalorder %s306, %s308
      %p312 = scmp.eq.s32.totalorder %s36, 0
      %p313 = por %p311, %p312
      %p314 = scmp.ne.s32.totalorder %s306, %s308
      %p315 = scmp.eq.s32.totalorder %s41, 3
      %p316 = por %p314, %p315
      %p317 = scmp.ne.s32.totalorder %s308, %s309
      %p318 = scmp.eq.s32.totalorder %s41, 0
      %p319 = por %p317, %p318
      %p320 = scmp.ne.s32.totalorder %s308, %s309
      %p321 = scmp.eq.s32.totalorder %s42, 3
      %p322 = por %p320, %p321
      %p324 = scmp.ne.s32.totalorder %s309, %s323
      %p325 = scmp.eq.s32.totalorder %s42, 0
      %p326 = por %p324, %p325
      %s328 = sadd.s32 %s327, 1
      %p331 = scmp.eq.s32.totalorder %s36, 3
      %p332 = scmp.ne.s32.totalorder %s327, %s329
      %p333 = scmp.eq.s32.totalorder %s36, 0
      %p334 = por %p332, %p333
      %p335 = scmp.ne.s32.totalorder %s327, %s329
      %p336 = scmp.eq.s32.totalorder %s41, 3
      %p337 = por %p335, %p336
      %p338 = scmp.ne.s32.totalorder %s329, %s330
      %p339 = scmp.eq.s32.totalorder %s41, 0
      %p340 = por %p338, %p339
      %p341 = scmp.ne.s32.totalorder %s329, %s330
      %p342 = scmp.eq.s32.totalorder %s42, 3
      %p343 = por %p341, %p342
      %p345 = scmp.ne.s32.totalorder %s330, %s344
      %p346 = scmp.eq.s32.totalorder %s42, 0
      %p347 = por %p345, %p346
      %s349 = sadd.s32 %s348, 1
      %p352 = scmp.eq.s32.totalorder %s36, 3
      %p353 = scmp.ne.s32.totalorder %s348, %s350
      %p354 = scmp.eq.s32.totalorder %s36, 0
      %p355 = por %p353, %p354
      %p356 = scmp.ne.s32.totalorder %s348, %s350
      %p357 = scmp.eq.s32.totalorder %s41, 3
      %p358 = por %p356, %p357
      %p359 = scmp.ne.s32.totalorder %s350, %s351
      %p360 = scmp.eq.s32.totalorder %s41, 0
      %p361 = por %p359, %p360
      %p362 = scmp.ne.s32.totalorder %s350, %s351
      %p363 = scmp.eq.s32.totalorder %s42, 3
      %p364 = por %p362, %p363
      %p366 = scmp.ne.s32.totalorder %s351, %s365
      %p367 = scmp.eq.s32.totalorder %s42, 0
      %p368 = por %p366, %p367
      %s370 = sadd.s32 %s369, 1
      %p373 = scmp.eq.s32.totalorder %s36, 3
      %p374 = scmp.ne.s32.totalorder %s369, %s371
      %p375 = scmp.eq.s32.totalorder %s36, 0
      %p376 = por %p374, %p375
      %p377 = scmp.ne.s32.totalorder %s369, %s371
      %p378 = scmp.eq.s32.totalorder %s41, 3
      %p379 = por %p377, %p378
      %p380 = scmp.ne.s32.totalorder %s371, %s372
      %p381 = scmp.eq.s32.totalorder %s41, 0
      %p382 = por %p380, %p381
      %p383 = scmp.ne.s32.totalorder %s371, %s372
      %p384 = scmp.eq.s32.totalorder %s42, 3
      %p385 = por %p383, %p384
      %p387 = scmp.ne.s32.totalorder %s372, %s386
      %p388 = scmp.eq.s32.totalorder %s42, 0
      %p389 = por %p387, %p388
      %s391 = sadd.s32 %s390, 1
      %p394 = scmp.eq.s32.totalorder %s36, 3
      %p395 = scmp.ne.s32.totalorder %s390, %s392
      %p396 = scmp.eq.s32.totalorder %s36, 0
      %p397 = por %p395, %p396
      %p398 = scmp.ne.s32.totalorder %s390, %s392
      %p399 = scmp.eq.s32.totalorder %s41, 3
      %p400 = por %p398, %p399
      %p401 = scmp.ne.s32.totalorder %s392, %s393
      %p402 = scmp.eq.s32.totalorder %s41, 0
      %p403 = por %p401, %p402
      %p404 = scmp.ne.s32.totalorder %s392, %s393
      %p405 = scmp.eq.s32.totalorder %s42, 3
      %p406 = por %p404, %p405
      %p408 = scmp.ne.s32.totalorder %s393, %s407
      %p409 = scmp.eq.s32.totalorder %s42, 0
      %p410 = por %p408, %p409
      %s412 = sadd.s32 %s411, 1
      %p415 = scmp.eq.s32.totalorder %s36, 3
      %p416 = scmp.ne.s32.totalorder %s411, %s413
      %p417 = scmp.eq.s32.totalorder %s36, 0
      %p418 = por %p416, %p417
      %p419 = scmp.ne.s32.totalorder %s411, %s413
      %p420 = scmp.eq.s32.totalorder %s41, 3
      %p421 = por %p419, %p420
      %p422 = scmp.ne.s32.totalorder %s413, %s414
      %p423 = scmp.eq.s32.totalorder %s41, 0
      %p424 = por %p422, %p423
      %p425 = scmp.ne.s32.totalorder %s413, %s414
      %p426 = scmp.eq.s32.totalorder %s42, 3
      %p427 = por %p425, %p426
      %p429 = scmp.ne.s32.totalorder %s414, %s428
      %p430 = scmp.eq.s32.totalorder %s42, 0
      %p431 = por %p429, %p430
      %s433 = sadd.s32 %s432, 1
      %p436 = scmp.eq.s32.totalorder %s36, 3
      %p437 = scmp.ne.s32.totalorder %s432, %s434
      %p438 = scmp.eq.s32.totalorder %s36, 0
      %p439 = por %p437, %p438
      %p440 = scmp.ne.s32.totalorder %s432, %s434
      %p441 = scmp.eq.s32.totalorder %s41, 3
      %p442 = por %p440, %p441
      %p443 = scmp.ne.s32.totalorder %s434, %s435
      %p444 = scmp.eq.s32.totalorder %s41, 0
      %p445 = por %p443, %p444
      %p446 = scmp.ne.s32.totalorder %s434, %s435
      %p447 = scmp.eq.s32.totalorder %s42, 3
      %p448 = por %p446, %p447
      %p450 = scmp.ne.s32.totalorder %s435, %s449
      %p451 = scmp.eq.s32.totalorder %s42, 0
      %p452 = por %p450, %p451
      %s454 = sadd.s32 %s453, 1
      %p457 = scmp.eq.s32.totalorder %s36, 3
      %p458 = scmp.ne.s32.totalorder %s453, %s455
      %p459 = scmp.eq.s32.totalorder %s36, 0
      %p460 = por %p458, %p459
      %p461 = scmp.ne.s32.totalorder %s453, %s455
      %p462 = scmp.eq.s32.totalorder %s41, 3
      %p463 = por %p461, %p462
      %p464 = scmp.ne.s32.totalorder %s455, %s456
      %p465 = scmp.eq.s32.totalorder %s41, 0
      %p466 = por %p464, %p465
      %p467 = scmp.ne.s32.totalorder %s455, %s456
      %p468 = scmp.eq.s32.totalorder %s42, 3
      %p469 = por %p467, %p468
      %p471 = scmp.ne.s32.totalorder %s456, %s470
      %p472 = scmp.eq.s32.totalorder %s42, 0
      %p473 = por %p471, %p472
      %s474 = ssub.s32 %s36, %s43
      %p475 = scmp.eq.s32.totalorder %s474, 0
      %s477 = sadd.s32 %s476, 1
      %s478 = scalar_select %p475, %s476, %s477
      %p481 = pneg %p475
      %p482 = scmp.eq.s32.totalorder %s36, 3
      %p483 = por %p481, %p482
      %p484 = scmp.ne.s32.totalorder %s476, %s479
      %p485 = scmp.eq.s32.totalorder %s36, 0
      %p486 = por %p484, %p485
      %p487 = scmp.ne.s32.totalorder %s476, %s479
      %p488 = scmp.eq.s32.totalorder %s41, 3
      %p489 = por %p487, %p488
      %p490 = scmp.ne.s32.totalorder %s479, %s480
      %p491 = scmp.eq.s32.totalorder %s41, 0
      %p492 = por %p490, %p491
      %p493 = scmp.ne.s32.totalorder %s479, %s480
      %p494 = scmp.eq.s32.totalorder %s42, 3
      %p495 = por %p493, %p494
      %p497 = scmp.ne.s32.totalorder %s480, %s496
      %p498 = scmp.eq.s32.totalorder %s42, 0
      %p499 = por %p497, %p498
      %p500 = scmp.le.s32.totalorder 1, %s36
      %p501 = scmp.lt.s32.totalorder %s36, 5
      %p502 = pnand %p500, %p501
      %p503 = pneg %p502
      // Predicated region
      $region9: #{tpu_custom_call.1} parent=5 // pred_check
        _
      $region10: #{tpu_custom_call.1} parent=5 // pred_check_branch
        %505 = sbr.rel (%p502) target = $region12
      $region11: #{tpu_custom_call.1} parent=5 // pred_region
        %s506 = ssub.s32 %s36, 1
        // Predicated region
        $region13: #{tpu_custom_call.1} parent=11 // pred_check
          %p507 = pneg %p109
        $region14: #{tpu_custom_call.1} parent=11 // pred_check_branch
          %509 = sbr.rel (%p507) target = $region16
        $region15: #{tpu_custom_call.1} parent=11 // pred_region
          %s511 = ssub.s32 128, 128
          %512 = vsyncadd [#allocation6], %s511
          %s513 = sshll.u32 [#allocation5], 4
          %s514 = int_to_ptr.vmem [resolvable:$true] %s513
          %519 = dma.hbm_to_vmem [thread:$0]  %s2, 128, %s514, [#allocation6], 64, 64, 4
        $region16: #{tpu_custom_call.1} parent=11 // pred_fallthru
          _
        // Predicated region
        $region17: #{tpu_custom_call.1} parent=11 // pred_check
          %p520 = pneg %p130
        $region18: #{tpu_custom_call.1} parent=11 // pred_check_branch
          %522 = sbr.rel (%p520) target = $region20
        $region19: #{tpu_custom_call.1} parent=11 // pred_region
          %s524 = ssub.s32 16, 16
          %525 = vsyncadd [#allocation6], %s524
          %s527 = sshll.u32 [#allocation7], 4
          %s528 = int_to_ptr.vmem [resolvable:$true] %s527
          %530 = dma.hbm_to_vmem [thread:$0]  %s3, 16, %s528, [#allocation6]
        $region20: #{tpu_custom_call.1} parent=11 // pred_fallthru
          _
        // Predicated region
        $region21: #{tpu_custom_call.1} parent=11 // pred_check
          %p531 = pneg %p151
        $region22: #{tpu_custom_call.1} parent=11 // pred_check_branch
          %533 = sbr.rel (%p531) target = $region24
        $region23: #{tpu_custom_call.1} parent=11 // pred_region
          _
        $region24: #{tpu_custom_call.1} parent=11 // pred_fallthru
          _
        // Predicated region
        $region25: #{tpu_custom_call.1} parent=11 // pred_check
          %p534 = pneg %p172
        $region26: #{tpu_custom_call.1} parent=11 // pred_check_branch
          %536 = sbr.rel (%p534) target = $region28
        $region27: #{tpu_custom_call.1} parent=11 // pred_region
          %s538 = ssub.s32 16, 16
          %539 = vsyncadd [#allocation9], %s538
          %s541 = sshll.u32 [#allocation8], 4
          %s542 = int_to_ptr.vmem [resolvable:$true] %s541
          %544 = dma.hbm_to_vmem [thread:$0]  %s5, 16, %s542, [#allocation9]
        $region28: #{tpu_custom_call.1} parent=11 // pred_fallthru
          _
        // Predicated region
        $region29: #{tpu_custom_call.1} parent=11 // pred_check
          %p545 = pneg %p193
        $region30: #{tpu_custom_call.1} parent=11 // pred_check_branch
          %547 = sbr.rel (%p545) target = $region32
        $region31: #{tpu_custom_call.1} parent=11 // pred_region
          %s549 = ssub.s32 256, 256
          %550 = vsyncadd [#allocation9], %s549
          %s551 = sshll.u32 [#allocation10], 4
          %s552 = int_to_ptr.vmem [resolvable:$true] %s551
          %557 = dma.hbm_to_vmem [thread:$0]  %s6, 256, %s552, [#allocation9], 64, 64, 4
        $region32: #{tpu_custom_call.1} parent=11 // pred_fallthru
          _
        // Predicated region
        $region33: #{tpu_custom_call.1} parent=11 // pred_check
          %p558 = pneg %p214
        $region34: #{tpu_custom_call.1} parent=11 // pred_check_branch
          %560 = sbr.rel (%p558) target = $region36
        $region35: #{tpu_custom_call.1} parent=11 // pred_region
          %s562 = ssub.s32 16, 16
          %563 = vsyncadd [#allocation12], %s562
          %s565 = sshll.u32 [#allocation11], 4
          %s566 = int_to_ptr.vmem [resolvable:$true] %s565
          %568 = dma.hbm_to_vmem [thread:$0]  %s7, 16, %s566, [#allocation12]
        $region36: #{tpu_custom_call.1} parent=11 // pred_fallthru
          _
        // Predicated region
        $region37: #{tpu_custom_call.1} parent=11 // pred_check
          %p569 = pneg %p235
        $region38: #{tpu_custom_call.1} parent=11 // pred_check_branch
          %571 = sbr.rel (%p569) target = $region40
        $region39: #{tpu_custom_call.1} parent=11 // pred_region
          %s573 = ssub.s32 256, 256
          %574 = vsyncadd [#allocation12], %s573
          %s575 = sshll.u32 [#allocation13], 4
          %s576 = int_to_ptr.vmem [resolvable:$true] %s575
          %581 = dma.hbm_to_vmem [thread:$0]  %s8, 256, %s576, [#allocation12], 64, 64, 4
        $region40: #{tpu_custom_call.1} parent=11 // pred_fallthru
          _
        // Predicated region
        $region41: #{tpu_custom_call.1} parent=11 // pred_check
          %p582 = pneg %p256
        $region42: #{tpu_custom_call.1} parent=11 // pred_check_branch
          %584 = sbr.rel (%p582) target = $region44
        $region43: #{tpu_custom_call.1} parent=11 // pred_region
          %s586 = ssub.s32 16, 16
          %587 = vsyncadd [#allocation15], %s586
          %s589 = sshll.u32 [#allocation14], 4
          %s590 = int_to_ptr.vmem [resolvable:$true] %s589
          %592 = dma.hbm_to_vmem [thread:$0]  %s9, 16, %s590, [#allocation15]
        $region44: #{tpu_custom_call.1} parent=11 // pred_fallthru
          _
        // Predicated region
        $region45: #{tpu_custom_call.1} parent=11 // pred_check
          %p593 = pneg %p277
        $region46: #{tpu_custom_call.1} parent=11 // pred_check_branch
          %595 = sbr.rel (%p593) target = $region48
        $region47: #{tpu_custom_call.1} parent=11 // pred_region
          _
        $region48: #{tpu_custom_call.1} parent=11 // pred_fallthru
          _
        // Predicated region
        $region49: #{tpu_custom_call.1} parent=11 // pred_check
          %p596 = pneg %p298
        $region50: #{tpu_custom_call.1} parent=11 // pred_check_branch
          %598 = sbr.rel (%p596) target = $region52
        $region51: #{tpu_custom_call.1} parent=11 // pred_region
          _
        $region52: #{tpu_custom_call.1} parent=11 // pred_fallthru
          _
        // Predicated region
        $region53: #{tpu_custom_call.1} parent=11 // pred_check
          %p599 = pneg %p319
        $region54: #{tpu_custom_call.1} parent=11 // pred_check_branch
          %601 = sbr.rel (%p599) target = $region56
        $region55: #{tpu_custom_call.1} parent=11 // pred_region
          %s603 = ssub.s32 256, 256
          %604 = vsyncadd [#allocation15], %s603
          %s605 = sshll.u32 [#allocation16], 4
          %s606 = int_to_ptr.vmem [resolvable:$true] %s605
          %611 = dma.hbm_to_vmem [thread:$0]  %s12, 256, %s606, [#allocation15], 64, 64, 4
        $region56: #{tpu_custom_call.1} parent=11 // pred_fallthru
          _
        // Predicated region
        $region57: #{tpu_custom_call.1} parent=11 // pred_check
          %p612 = pneg %p340
        $region58: #{tpu_custom_call.1} parent=11 // pred_check_branch
          %614 = sbr.rel (%p612) target = $region60
        $region59: #{tpu_custom_call.1} parent=11 // pred_region
          _
        $region60: #{tpu_custom_call.1} parent=11 // pred_fallthru
          _
        // Predicated region
        $region61: #{tpu_custom_call.1} parent=11 // pred_check
          %p615 = pneg %p361
        $region62: #{tpu_custom_call.1} parent=11 // pred_check_branch
          %617 = sbr.rel (%p615) target = $region64
        $region63: #{tpu_custom_call.1} parent=11 // pred_region
          _
        $region64: #{tpu_custom_call.1} parent=11 // pred_fallthru
          _
        // Predicated region
        $region65: #{tpu_custom_call.1} parent=11 // pred_check
          %p618 = pneg %p382
        $region66: #{tpu_custom_call.1} parent=11 // pred_check_branch
          %620 = sbr.rel (%p618) target = $region68
        $region67: #{tpu_custom_call.1} parent=11 // pred_region
          _
        $region68: #{tpu_custom_call.1} parent=11 // pred_fallthru
          _
        // Predicated region
        $region69: #{tpu_custom_call.1} parent=11 // pred_check
          %p621 = pneg %p403
        $region70: #{tpu_custom_call.1} parent=11 // pred_check_branch
          %623 = sbr.rel (%p621) target = $region72
        $region71: #{tpu_custom_call.1} parent=11 // pred_region
          _
        $region72: #{tpu_custom_call.1} parent=11 // pred_fallthru
          _
        // Predicated region
        $region73: #{tpu_custom_call.1} parent=11 // pred_check
          %p624 = pneg %p424
        $region74: #{tpu_custom_call.1} parent=11 // pred_check_branch
          %626 = sbr.rel (%p624) target = $region76
        $region75: #{tpu_custom_call.1} parent=11 // pred_region
          _
        $region76: #{tpu_custom_call.1} parent=11 // pred_fallthru
          _
        // Predicated region
        $region77: #{tpu_custom_call.1} parent=11 // pred_check
          %p627 = pneg %p445
        $region78: #{tpu_custom_call.1} parent=11 // pred_check_branch
          %629 = sbr.rel (%p627) target = $region80
        $region79: #{tpu_custom_call.1} parent=11 // pred_region
          _
        $region80: #{tpu_custom_call.1} parent=11 // pred_fallthru
          _
        // Predicated region
        $region81: #{tpu_custom_call.1} parent=11 // pred_check
          %p630 = pneg %p466
        $region82: #{tpu_custom_call.1} parent=11 // pred_check_branch
          %632 = sbr.rel (%p630) target = $region84
        $region83: #{tpu_custom_call.1} parent=11 // pred_region
          _
        $region84: #{tpu_custom_call.1} parent=11 // pred_fallthru
          _
      $region12: #{tpu_custom_call.1} parent=5 // pred_fallthru
        _
      %p633 = scmp.lt.s32.totalorder %s36, 4
      // Predicated region
      $region85: #{tpu_custom_call.1} parent=5 // pred_check
        %p634 = pneg %p633
      $region86: #{tpu_custom_call.1} parent=5 // pred_check_branch
        %636 = sbr.rel (%p634) target = $region88
      $region87: #{tpu_custom_call.1} parent=5 // pred_region
        // Predicated region
        $region89: #{tpu_custom_call.1} parent=87 // pred_check
          %p637 = pneg %p56
        $region90: #{tpu_custom_call.1} parent=87 // pred_check_branch
          %639 = sbr.rel (%p637) target = $region92
        $region91: #{tpu_custom_call.1} parent=87 // pred_region
          %p640 = scmp.lt.s32.totalorder %s36, 3
          %s641 = scalar_select %p640, %s36, 3
          %s642 = smul.addr %s641, 8
          %s643 = scalar_lea.vmem %s0, %s642
        $region92: #{tpu_custom_call.1} parent=87 // pred_fallthru
          _
        // Predicated region
        $region93: #{tpu_custom_call.1} parent=87 // pred_check
          %p644 = pneg %p82
        $region94: #{tpu_custom_call.1} parent=87 // pred_check_branch
          %646 = sbr.rel (%p644) target = $region96
        $region95: #{tpu_custom_call.1} parent=87 // pred_region
          %s647 = sand.u32 %s72, 1
          %s648 = scalar_lea.sflag [#allocation3], %s647
          %s649 = sand.u32 %s72, 1
          %s650 = smul.addr %s649, 8
          %s651 = scalar_lea.vmem [#allocation2], %s650
          %s653 = ssub.s32 128, 128
          %654 = vsyncadd %s648, %s653
          %s655 = smul.addr %s36, 128
          %s656 = scalar_lea.hbm %s1, %s655
          %s658 = sshll.u32 %s651, 4
          %s659 = int_to_ptr.vmem [resolvable:$true] %s658
          %661 = dma.hbm_to_vmem [thread:$0]  %s656, 128, %s659, %s648
        $region96: #{tpu_custom_call.1} parent=87 // pred_fallthru
          _
      $region88: #{tpu_custom_call.1} parent=5 // pred_fallthru
        _
      %p662 = scmp.le.s32.totalorder 1, %s36
      %p663 = scmp.lt.s32.totalorder %s36, 5
      %p664 = pnand %p662, %p663
      %p665 = pneg %p664
      // Predicated region
      $region97: #{tpu_custom_call.1} parent=5 // pred_check
        _
      $region98: #{tpu_custom_call.1} parent=5 // pred_check_branch
        %667 = sbr.rel (%p664) target = $region100
      $region99: #{tpu_custom_call.1} parent=5 // pred_region
        %s668 = ssub.s32 %s36, 1
        %s669 = sand.u32 %s75, 1
        %s670 = scalar_lea.sflag [#allocation3], %s669
        %s671 = sand.u32 %s75, 1
        %s672 = smul.addr %s671, 8
        %s673 = scalar_lea.vmem [#allocation2], %s672
        // Predicated region
        $region101: #{tpu_custom_call.1} parent=99 // pred_check
          %p674 = pneg %p88
        $region102: #{tpu_custom_call.1} parent=99 // pred_check_branch
          %676 = sbr.rel (%p674) target = $region104
        $region103: #{tpu_custom_call.1} parent=99 // pred_region
          %677 = dma.done %s670, 128
        $region104: #{tpu_custom_call.1} parent=99 // pred_fallthru
          _
        // Predicated region
        $region105: #{tpu_custom_call.1} parent=99 // pred_check
          %p678 = pneg %p109
        $region106: #{tpu_custom_call.1} parent=99 // pred_check_branch
          %680 = sbr.rel (%p678) target = $region108
        $region107: #{tpu_custom_call.1} parent=99 // pred_region
          %681 = dma.done [#allocation6], 128
        $region108: #{tpu_custom_call.1} parent=99 // pred_fallthru
          _
        // Predicated region
        $region109: #{tpu_custom_call.1} parent=99 // pred_check
          %p682 = pneg %p130
        $region110: #{tpu_custom_call.1} parent=99 // pred_check_branch
          %684 = sbr.rel (%p682) target = $region112
        $region111: #{tpu_custom_call.1} parent=99 // pred_region
          %685 = dma.done [#allocation6], 16
        $region112: #{tpu_custom_call.1} parent=99 // pred_fallthru
          _
        // Predicated region
        $region113: #{tpu_custom_call.1} parent=99 // pred_check
          %p686 = pneg %p172
        $region114: #{tpu_custom_call.1} parent=99 // pred_check_branch
          %688 = sbr.rel (%p686) target = $region116
        $region115: #{tpu_custom_call.1} parent=99 // pred_region
          %689 = dma.done [#allocation9], 16
        $region116: #{tpu_custom_call.1} parent=99 // pred_fallthru
          _
        // Predicated region
        $region117: #{tpu_custom_call.1} parent=99 // pred_check
          %p690 = pneg %p193
        $region118: #{tpu_custom_call.1} parent=99 // pred_check_branch
          %692 = sbr.rel (%p690) target = $region120
        $region119: #{tpu_custom_call.1} parent=99 // pred_region
          %693 = dma.done [#allocation9], 256
        $region120: #{tpu_custom_call.1} parent=99 // pred_fallthru
          _
        // Predicated region
        $region121: #{tpu_custom_call.1} parent=99 // pred_check
          %p694 = pneg %p214
        $region122: #{tpu_custom_call.1} parent=99 // pred_check_branch
          %696 = sbr.rel (%p694) target = $region124
        $region123: #{tpu_custom_call.1} parent=99 // pred_region
          %697 = dma.done [#allocation12], 16
        $region124: #{tpu_custom_call.1} parent=99 // pred_fallthru
          _
        // Predicated region
        $region125: #{tpu_custom_call.1} parent=99 // pred_check
          %p698 = pneg %p235
        $region126: #{tpu_custom_call.1} parent=99 // pred_check_branch
          %700 = sbr.rel (%p698) target = $region128
        $region127: #{tpu_custom_call.1} parent=99 // pred_region
          %701 = dma.done [#allocation12], 256
        $region128: #{tpu_custom_call.1} parent=99 // pred_fallthru
          _
        // Predicated region
        $region129: #{tpu_custom_call.1} parent=99 // pred_check
          %p702 = pneg %p256
        $region130: #{tpu_custom_call.1} parent=99 // pred_check_branch
          %704 = sbr.rel (%p702) target = $region132
        $region131: #{tpu_custom_call.1} parent=99 // pred_region
          %705 = dma.done [#allocation15], 16
        $region132: #{tpu_custom_call.1} parent=99 // pred_fallthru
          _
        // Predicated region
        $region133: #{tpu_custom_call.1} parent=99 // pred_check
          %p706 = pneg %p319
        $region134: #{tpu_custom_call.1} parent=99 // pred_check_branch
          %708 = sbr.rel (%p706) target = $region136
        $region135: #{tpu_custom_call.1} parent=99 // pred_region
          %709 = dma.done [#allocation15], 256
        $region136: #{tpu_custom_call.1} parent=99 // pred_fallthru
          _
        %p710 = scmp.lt.s32.totalorder %s41, 3
        %s711 = scalar_select %p710, %s41, 3
        %s712 = smul.addr %s711, 8
        %s713 = scalar_lea.vmem %s0, %s712
        %p714 = pneg %p62
        %p715 = pneg %p59
        %s716 = sand.u32 %s75, 1
        %s717 = scalar_lea.sflag [#allocation3], %s716
        %s718 = sand.u32 %s75, 1
        %s719 = smul.addr %s718, 8
        %s720 = scalar_lea.vmem [#allocation2], %s719
        %p721 = pneg %p88
        %p722 = pneg %p85
        %p723 = pneg %p109
        %p724 = pneg %p106
        %p725 = pneg %p130
        %p726 = pneg %p127
        %p727 = pneg %p151
        %p728 = pneg %p148
        %p729 = pneg %p172
        %p730 = pneg %p169
        %p731 = pneg %p193
        %p732 = pneg %p190
        %p733 = pneg %p214
        %p734 = pneg %p211
        %p735 = pneg %p235
        %p736 = pneg %p232
        %p737 = pneg %p256
        %p738 = pneg %p253
        %p739 = pneg %p277
        %p740 = pneg %p274
        %p741 = pneg %p298
        %p742 = pneg %p295
        %p743 = pneg %p319
        %p744 = pneg %p316
        %p745 = pneg %p340
        %p746 = pneg %p337
        %p747 = pneg %p361
        %p748 = pneg %p358
        %p749 = pneg %p382
        %p750 = pneg %p379
        %p751 = pneg %p403
        %p752 = pneg %p400
        %p753 = pneg %p424
        %p754 = pneg %p421
        %p755 = pneg %p445
        %p756 = pneg %p442
        %p757 = pneg %p466
        %p758 = pneg %p463
        %p759 = pneg %p492
        %p760 = pneg %p489
        %s761 = sand.u32 %s479, 1
        %s762 = scalar_lea.sflag [#allocation4], %s761
        %s763 = sand.u32 %s479, 1
        %s764 = smul.addr %s763, 8
        %s765 = scalar_lea.vmem [#allocation17], %s764
        %p766 = scmp.lt.s32.totalorder %s41, 3
        %s767 = scalar_select %p766, %s41, 3
        %s768 = smul.addr %s767, 8
        %s769 = scalar_lea.vmem %s0, %s768
        %v771 = vld [vmem:[%s769] sm:$0xff]
        %v772 = vld [vmem:[%s673] sm:$0xff]
        %v773 = vld [vmem:[#allocation5] sm:$0xf]
        %v774 = vld [vmem:[#allocation5 + $0x4] sm:$0xf]
        %v775 = vpack.c.bf16 %v771, %v771
        %v776 = vld [vmem:[#allocation7] sm:$0x1]
        %v778 = vlaneseq
        %v779 = vshrl.u32 %v778, 7
        %v780 = vsub.s32 0, %v779
        %v781 = vrot.slane %v776, %v780
        %v785 = vunpack.c.l.b16 %v773
        %v786 = vunpack.c.l.b16 %v774
        %v787 = vpack.c.b16 %v786, %v785
        %vm789 = vcmask 130048
        %v791 = vsel %vm789, %v775, 0
        %793 = vmatprep.subr.bf16.mxu0 0
        %794 = vmatpush1.bf16.msra.mxu0 0
        %795 = vmatprep.subr.bf16.mxu0 0
        %796 = vmatpush1.bf16.msra.mxu0 0
        %797 = vmatprep.subr.bf16.mxu0 0
        %798 = vmatpush1.bf16.msra.mxu0 0
        %799 = vmatprep.subr.bf16.mxu0 0
        %800 = vmatpush1.bf16.msra.mxu0 0
        %801 = vmatprep.subr.bf16.mxu0 0
        %802 = vmatpush1.bf16.msra.mxu0 0
        %803 = vmatprep.subr.bf16.mxu0 0
        %804 = vmatpush1.bf16.msra.mxu0 0
        %805 = vmatprep.subr.bf16.mxu0 0
        %806 = vmatpush1.bf16.msra.mxu0 0
        %807 = vmatprep.subr.bf16.mxu0 0
        %808 = vmatpush1.bf16.msra.mxu0 %v787
        %809 = vmatprep.subr.bf16.mxu0 0
        %810 = vmatpush2.bf16.msra.mxu0 0
        %811 = vmatprep.subr.bf16.mxu0 0
        %812 = vmatpush2.bf16.msra.mxu0 0
        %813 = vmatprep.subr.bf16.mxu0 0
        %814 = vmatpush2.bf16.msra.mxu0 0
        %815 = vmatprep.subr.bf16.mxu0 0
        %816 = vmatpush2.bf16.msra.mxu0 0
        %817 = vmatprep.subr.bf16.mxu0 0
        %818 = vmatpush2.bf16.msra.mxu0 0
        %819 = vmatprep.subr.bf16.mxu0 0
        %820 = vmatpush2.bf16.msra.mxu0 0
        %821 = vmatprep.subr.bf16.mxu0 0
        %822 = vmatpush2.bf16.msra.mxu0 0
        %823 = vmatprep.subr.bf16.mxu0 0
        %824 = vmatpush2.bf16.msra.mxu0 0
        %825 = vmatprep.mubr.bf16.mxu0 0
        %826 = vmatmul.mubr.bf16.gmra.mxu0 %v791
        %v827 = vpop.f32.mrf.mxu0
        %v828 = vadd.f32 %v781, %v827
        %v829 = vpop.f32.mrf.mxu0
        %v830 = vpop.f32.mrf.mxu0
        %v831 = vpop.f32.mrf.mxu0
        %832 = vdwg.mxu0
        %v833 = vld [vmem:[%s4] sm:$0xf]
        %v834 = vld [vmem:[%s4 + $0x4] sm:$0xf]
        %v835 = vld [vmem:[%s4 + $0x8] sm:$0xf]
        %v836 = vld [vmem:[%s4 + $0xc] sm:$0xf]
        %v837 = vpack.c.bf16 %v828, %v828
        %v838 = vld [vmem:[#allocation8] sm:$0x1]
        %v840 = vlaneseq
        %v841 = vshrl.u32 %v840, 7
        %v842 = vsub.s32 0, %v841
        %v843 = vrot.slane %v838, %v842
        %v849 = vunpack.c.l.b16 %v833
        %v850 = vunpack.c.l.b16 %v834
        %v851 = vunpack.c.l.b16 %v835
        %v852 = vunpack.c.l.b16 %v836
        %v853 = vpack.c.b16 %v850, %v849
        %v854 = vpack.c.b16 %v852, %v851
        %vm857 = vcmask 261120
        %v859 = vsel %vm857, %v837, 0
        %861 = vmatprep.subr.bf16.mxu0 0
        %862 = vmatpush1.bf16.msra.mxu0 0
        %863 = vmatprep.subr.bf16.mxu0 0
        %864 = vmatpush1.bf16.msra.mxu0 0
        %865 = vmatprep.subr.bf16.mxu0 0
        %866 = vmatpush1.bf16.msra.mxu0 0
        %867 = vmatprep.subr.bf16.mxu0 0
        %868 = vmatpush1.bf16.msra.mxu0 0
        %869 = vmatprep.subr.bf16.mxu0 0
        %870 = vmatpush1.bf16.msra.mxu0 0
        %871 = vmatprep.subr.bf16.mxu0 0
        %872 = vmatpush1.bf16.msra.mxu0 0
        %873 = vmatprep.subr.bf16.mxu0 0
        %874 = vmatpush1.bf16.msra.mxu0 %v854
        %875 = vmatprep.subr.bf16.mxu0 0
        %876 = vmatpush1.bf16.msra.mxu0 %v853
        %877 = vmatprep.subr.bf16.mxu0 0
        %878 = vmatpush2.bf16.msra.mxu0 0
        %879 = vmatprep.subr.bf16.mxu0 0
        %880 = vmatpush2.bf16.msra.mxu0 0
        %881 = vmatprep.subr.bf16.mxu0 0
        %882 = vmatpush2.bf16.msra.mxu0 0
        %883 = vmatprep.subr.bf16.mxu0 0
        %884 = vmatpush2.bf16.msra.mxu0 0
        %885 = vmatprep.subr.bf16.mxu0 0
        %886 = vmatpush2.bf16.msra.mxu0 0
        %887 = vmatprep.subr.bf16.mxu0 0
        %888 = vmatpush2.bf16.msra.mxu0 0
        %889 = vmatprep.subr.bf16.mxu0 0
        %890 = vmatpush2.bf16.msra.mxu0 0
        %891 = vmatprep.subr.bf16.mxu0 0
        %892 = vmatpush2.bf16.msra.mxu0 0
        %893 = vmatprep.mubr.bf16.mxu0 0
        %894 = vmatmul.mubr.bf16.gmra.mxu0 %v859
        %v895 = vpop.f32.mrf.mxu0
        %v896 = vadd.f32 %v843, %v895
        %v897 = vpop.f32.mrf.mxu0
        %v898 = vpop.f32.mrf.mxu0
        %v899 = vpop.f32.mrf.mxu0
        %900 = vdwg.mxu0
        %v901 = vld [vmem:[#allocation10] sm:$0xf]
        %v902 = vld [vmem:[#allocation10 + $0x4] sm:$0xf]
        %v903 = vld [vmem:[#allocation10 + $0x8] sm:$0xf]
        %v904 = vld [vmem:[#allocation10 + $0xc] sm:$0xf]
        %v905 = vld [vmem:[#allocation11] sm:$0x1]
        %v907 = vlaneseq
        %v908 = vshrl.u32 %v907, 7
        %v909 = vsub.s32 0, %v908
        %v910 = vrot.slane %v905, %v909
        %v916 = vunpack.c.l.b16 %v901
        %v917 = vunpack.c.l.b16 %v902
        %v918 = vunpack.c.l.b16 %v903
        %v919 = vunpack.c.l.b16 %v904
        %v920 = vpack.c.b16 %v917, %v916
        %v921 = vpack.c.b16 %v919, %v918
        %924 = vmatprep.subr.bf16.mxu0 0
        %925 = vmatpush1.bf16.msra.mxu0 0
        %926 = vmatprep.subr.bf16.mxu0 0
        %927 = vmatpush1.bf16.msra.mxu0 0
        %928 = vmatprep.subr.bf16.mxu0 0
        %929 = vmatpush1.bf16.msra.mxu0 0
        %930 = vmatprep.subr.bf16.mxu0 0
        %931 = vmatpush1.bf16.msra.mxu0 0
        %932 = vmatprep.subr.bf16.mxu0 0
        %933 = vmatpush1.bf16.msra.mxu0 0
        %934 = vmatprep.subr.bf16.mxu0 0
        %935 = vmatpush1.bf16.msra.mxu0 0
        %936 = vmatprep.subr.bf16.mxu0 0
        %937 = vmatpush1.bf16.msra.mxu0 %v921
        %938 = vmatprep.subr.bf16.mxu0 0
        %939 = vmatpush1.bf16.msra.mxu0 %v920
        %940 = vmatprep.subr.bf16.mxu0 0
        %941 = vmatpush2.bf16.msra.mxu0 0
        %942 = vmatprep.subr.bf16.mxu0 0
        %943 = vmatpush2.bf16.msra.mxu0 0
        %944 = vmatprep.subr.bf16.mxu0 0
        %945 = vmatpush2.bf16.msra.mxu0 0
        %946 = vmatprep.subr.bf16.mxu0 0
        %947 = vmatpush2.bf16.msra.mxu0 0
        %948 = vmatprep.subr.bf16.mxu0 0
        %949 = vmatpush2.bf16.msra.mxu0 0
        %950 = vmatprep.subr.bf16.mxu0 0
        %951 = vmatpush2.bf16.msra.mxu0 0
        %952 = vmatprep.subr.bf16.mxu0 0
        %953 = vmatpush2.bf16.msra.mxu0 0
        %954 = vmatprep.subr.bf16.mxu0 0
        %955 = vmatpush2.bf16.msra.mxu0 0
        %956 = vmatprep.mubr.bf16.mxu0 0
        %957 = vmatmul.mubr.bf16.gmra.mxu0 %v859
        %v958 = vpop.f32.mrf.mxu0
        %v959 = vadd.f32 %v910, %v958
        %v960 = vpop.f32.mrf.mxu0
        %v961 = vpop.f32.mrf.mxu0
        %v962 = vpop.f32.mrf.mxu0
        %963 = vdwg.mxu0
        %v964 = vld [vmem:[#allocation13] sm:$0xf]
        %v965 = vld [vmem:[#allocation13 + $0x4] sm:$0xf]
        %v966 = vld [vmem:[#allocation13 + $0x8] sm:$0xf]
        %v967 = vld [vmem:[#allocation13 + $0xc] sm:$0xf]
        %v968 = vld [vmem:[#allocation14] sm:$0x1]
        %v970 = vlaneseq
        %v971 = vshrl.u32 %v970, 7
        %v972 = vsub.s32 0, %v971
        %v973 = vrot.slane %v968, %v972
        %v979 = vunpack.c.l.b16 %v964
        %v980 = vunpack.c.l.b16 %v965
        %v981 = vunpack.c.l.b16 %v966
        %v982 = vunpack.c.l.b16 %v967
        %v983 = vpack.c.b16 %v980, %v979
        %v984 = vpack.c.b16 %v982, %v981
        %987 = vmatprep.subr.bf16.mxu0 0
        %988 = vmatpush1.bf16.msra.mxu0 0
        %989 = vmatprep.subr.bf16.mxu0 0
        %990 = vmatpush1.bf16.msra.mxu0 0
        %991 = vmatprep.subr.bf16.mxu0 0
        %992 = vmatpush1.bf16.msra.mxu0 0
        %993 = vmatprep.subr.bf16.mxu0 0
        %994 = vmatpush1.bf16.msra.mxu0 0
        %995 = vmatprep.subr.bf16.mxu0 0
        %996 = vmatpush1.bf16.msra.mxu0 0
        %997 = vmatprep.subr.bf16.mxu0 0
        %998 = vmatpush1.bf16.msra.mxu0 0
        %999 = vmatprep.subr.bf16.mxu0 0
        %1000 = vmatpush1.bf16.msra.mxu0 %v984
        %1001 = vmatprep.subr.bf16.mxu0 0
        %1002 = vmatpush1.bf16.msra.mxu0 %v983
        %1003 = vmatprep.subr.bf16.mxu0 0
        %1004 = vmatpush2.bf16.msra.mxu0 0
        %1005 = vmatprep.subr.bf16.mxu0 0
        %1006 = vmatpush2.bf16.msra.mxu0 0
        %1007 = vmatprep.subr.bf16.mxu0 0
        %1008 = vmatpush2.bf16.msra.mxu0 0
        %1009 = vmatprep.subr.bf16.mxu0 0
        %1010 = vmatpush2.bf16.msra.mxu0 0
        %1011 = vmatprep.subr.bf16.mxu0 0
        %1012 = vmatpush2.bf16.msra.mxu0 0
        %1013 = vmatprep.subr.bf16.mxu0 0
        %1014 = vmatpush2.bf16.msra.mxu0 0
        %1015 = vmatprep.subr.bf16.mxu0 0
        %1016 = vmatpush2.bf16.msra.mxu0 0
        %1017 = vmatprep.subr.bf16.mxu0 0
        %1018 = vmatpush2.bf16.msra.mxu0 0
        %1019 = vmatprep.mubr.bf16.mxu0 0
        %1020 = vmatmul.mubr.bf16.gmra.mxu0 %v859
        %v1021 = vpop.f32.mrf.mxu0
        %v1022 = vadd.f32 %v973, %v1021
        %v1023 = vpop.f32.mrf.mxu0
        %v1024 = vpop.f32.mrf.mxu0
        %v1025 = vpop.f32.mrf.mxu0
        %1026 = vdwg.mxu0
        %v1027 = vpack.c.bf16 %v896, %v896
        %v1028 = vpack.c.bf16 %v959, %v959
        %v1029 = vpack.c.bf16 %v1022, %v1022
        %vm1030 = vcmp.eq.f32.partialorder %v772, 0.0
        %vm1031 = vcmask 64512
        %v1033 = vsel %vm1031, %v1027, 0
        %v1036 = vsel %vm1031, %v1028, 0
        %1038 = vmatprep.subr.bf16.mxu0 0
        %1039 = vmatpush1.bf16.xpose.msra.mxu0 0
        %1040 = vmatprep.subr.bf16.mxu0 0
        %1041 = vmatpush1.bf16.xpose.msra.mxu0 0
        %1042 = vmatprep.subr.bf16.mxu0 0
        %1043 = vmatpush1.bf16.xpose.msra.mxu0 0
        %1044 = vmatprep.subr.bf16.mxu0 0
        %1045 = vmatpush1.bf16.xpose.msra.mxu0 0
        %1046 = vmatprep.subr.bf16.mxu0 0
        %1047 = vmatpush1.bf16.xpose.msra.mxu0 0
        %1048 = vmatprep.subr.bf16.mxu0 0
        %1049 = vmatpush1.bf16.xpose.msra.mxu0 0
        %1050 = vmatprep.subr.bf16.mxu0 0
        %1051 = vmatpush1.bf16.xpose.msra.mxu0 0
        %1052 = vmatprep.subr.bf16.mxu0 0
        %1053 = vmatpush1.bf16.xpose.msra.mxu0 %v1036
        %1054 = vmatprep.subr.bf16.mxu0 0
        %1055 = vmatpush2.bf16.xpose.msra.mxu0 0
        %1056 = vmatprep.subr.bf16.mxu0 0
        %1057 = vmatpush2.bf16.xpose.msra.mxu0 0
        %1058 = vmatprep.subr.bf16.mxu0 0
        %1059 = vmatpush2.bf16.xpose.msra.mxu0 0
        %1060 = vmatprep.subr.bf16.mxu0 0
        %1061 = vmatpush2.bf16.xpose.msra.mxu0 0
        %1062 = vmatprep.subr.bf16.mxu0 0
        %1063 = vmatpush2.bf16.xpose.msra.mxu0 0
        %1064 = vmatprep.subr.bf16.mxu0 0
        %1065 = vmatpush2.bf16.xpose.msra.mxu0 0
        %1066 = vmatprep.subr.bf16.mxu0 0
        %1067 = vmatpush2.bf16.xpose.msra.mxu0 0
        %1068 = vmatprep.subr.bf16.mxu0 0
        %1069 = vmatpush2.bf16.xpose.msra.mxu0 0
        %1070 = vmatprep.mubr.bf16.mxu0 0
        %1071 = vmatmul.mubr.bf16.gmra.mxu0 %v1033
        %v1072 = vpop.f32.mrf.mxu0
        %v1073 = vadd.f32 0.0, %v1072
        %v1074 = vpop.f32.mrf.mxu0
        %v1075 = vpop.f32.mrf.mxu0
        %v1076 = vpop.f32.mrf.mxu0
        %1077 = vdwg.mxu0
        %v1078 = vmul.f32 %v1073, 0.35355338
        %v1079 = vsel %vm1030, -1e+09, %v1078
        %1081 = vrot.lane.b32.xlu0 %v1027, 120
        %v1082 = vpop.permute.xlu0 %1081
        %1084 = vrot.lane.b32.xlu0 %v1028, 120
        %v1085 = vpop.permute.xlu0 %1084
        %v1087 = vsel %vm1031, %v1082, 0
        %v1090 = vsel %vm1031, %v1085, 0
        %1092 = vmatprep.subr.bf16.mxu0 0
        %1093 = vmatpush1.bf16.xpose.msra.mxu0 0
        %1094 = vmatprep.subr.bf16.mxu0 0
        %1095 = vmatpush1.bf16.xpose.msra.mxu0 0
        %1096 = vmatprep.subr.bf16.mxu0 0
        %1097 = vmatpush1.bf16.xpose.msra.mxu0 0
        %1098 = vmatprep.subr.bf16.mxu0 0
        %1099 = vmatpush1.bf16.xpose.msra.mxu0 0
        %1100 = vmatprep.subr.bf16.mxu0 0
        %1101 = vmatpush1.bf16.xpose.msra.mxu0 0
        %1102 = vmatprep.subr.bf16.mxu0 0
        %1103 = vmatpush1.bf16.xpose.msra.mxu0 0
        %1104 = vmatprep.subr.bf16.mxu0 0
        %1105 = vmatpush1.bf16.xpose.msra.mxu0 0
        %1106 = vmatprep.subr.bf16.mxu0 0
        %1107 = vmatpush1.bf16.xpose.msra.mxu0 %v1090
        %1108 = vmatprep.subr.bf16.mxu0 0
        %1109 = vmatpush2.bf16.xpose.msra.mxu0 0
        %1110 = vmatprep.subr.bf16.mxu0 0
        %1111 = vmatpush2.bf16.xpose.msra.mxu0 0
        %1112 = vmatprep.subr.bf16.mxu0 0
        %1113 = vmatpush2.bf16.xpose.msra.mxu0 0
        %1114 = vmatprep.subr.bf16.mxu0 0
        %1115 = vmatpush2.bf16.xpose.msra.mxu0 0
        %1116 = vmatprep.subr.bf16.mxu0 0
        %1117 = vmatpush2.bf16.xpose.msra.mxu0 0
        %1118 = vmatprep.subr.bf16.mxu0 0
        %1119 = vmatpush2.bf16.xpose.msra.mxu0 0
        %1120 = vmatprep.subr.bf16.mxu0 0
        %1121 = vmatpush2.bf16.xpose.msra.mxu0 0
        %1122 = vmatprep.subr.bf16.mxu0 0
        %1123 = vmatpush2.bf16.xpose.msra.mxu0 0
        %1124 = vmatprep.mubr.bf16.mxu0 0
        %1125 = vmatmul.mubr.bf16.gmra.mxu0 %v1087
        %v1126 = vpop.f32.mrf.mxu0
        %v1127 = vadd.f32 0.0, %v1126
        %v1128 = vpop.f32.mrf.mxu0
        %v1129 = vpop.f32.mrf.mxu0
        %v1130 = vpop.f32.mrf.mxu0
        %1131 = vdwg.mxu0
        %v1132 = vmul.f32 %v1127, 0.35355338
        %v1133 = vsel %vm1030, -1e+09, %v1132
        %1134 = vrot.lane.b32.xlu0 %v1027, 112
        %v1135 = vpop.permute.xlu0 %1134
        %1136 = vrot.lane.b32.xlu0 %v1028, 112
        %v1137 = vpop.permute.xlu0 %1136
        %v1139 = vsel %vm1031, %v1135, 0
        %v1142 = vsel %vm1031, %v1137, 0
        %1144 = vmatprep.subr.bf16.mxu0 0
        %1145 = vmatpush1.bf16.xpose.msra.mxu0 0
        %1146 = vmatprep.subr.bf16.mxu0 0
        %1147 = vmatpush1.bf16.xpose.msra.mxu0 0
        %1148 = vmatprep.subr.bf16.mxu0 0
        %1149 = vmatpush1.bf16.xpose.msra.mxu0 0
        %1150 = vmatprep.subr.bf16.mxu0 0
        %1151 = vmatpush1.bf16.xpose.msra.mxu0 0
        %1152 = vmatprep.subr.bf16.mxu0 0
        %1153 = vmatpush1.bf16.xpose.msra.mxu0 0
        %1154 = vmatprep.subr.bf16.mxu0 0
        %1155 = vmatpush1.bf16.xpose.msra.mxu0 0
        %1156 = vmatprep.subr.bf16.mxu0 0
        %1157 = vmatpush1.bf16.xpose.msra.mxu0 0
        %1158 = vmatprep.subr.bf16.mxu0 0
        %1159 = vmatpush1.bf16.xpose.msra.mxu0 %v1142
        %1160 = vmatprep.subr.bf16.mxu0 0
        %1161 = vmatpush2.bf16.xpose.msra.mxu0 0
        %1162 = vmatprep.subr.bf16.mxu0 0
        %1163 = vmatpush2.bf16.xpose.msra.mxu0 0
        %1164 = vmatprep.subr.bf16.mxu0 0
        %1165 = vmatpush2.bf16.xpose.msra.mxu0 0
        %1166 = vmatprep.subr.bf16.mxu0 0
        %1167 = vmatpush2.bf16.xpose.msra.mxu0 0
        %1168 = vmatprep.subr.bf16.mxu0 0
        %1169 = vmatpush2.bf16.xpose.msra.mxu0 0
        %1170 = vmatprep.subr.bf16.mxu0 0
        %1171 = vmatpush2.bf16.xpose.msra.mxu0 0
        %1172 = vmatprep.subr.bf16.mxu0 0
        %1173 = vmatpush2.bf16.xpose.msra.mxu0 0
        %1174 = vmatprep.subr.bf16.mxu0 0
        %1175 = vmatpush2.bf16.xpose.msra.mxu0 0
        %1176 = vmatprep.mubr.bf16.mxu0 0
        %1177 = vmatmul.mubr.bf16.gmra.mxu0 %v1139
        %v1178 = vpop.f32.mrf.mxu0
        %v1179 = vadd.f32 0.0, %v1178
        %v1180 = vpop.f32.mrf.mxu0
        %v1181 = vpop.f32.mrf.mxu0
        %v1182 = vpop.f32.mrf.mxu0
        %1183 = vdwg.mxu0
        %v1184 = vmul.f32 %v1179, 0.35355338
        %v1185 = vsel %vm1030, -1e+09, %v1184
        %1186 = vrot.lane.b32.xlu0 %v1027, 104
        %v1187 = vpop.permute.xlu0 %1186
        %1188 = vrot.lane.b32.xlu0 %v1028, 104
        %v1189 = vpop.permute.xlu0 %1188
        %v1191 = vsel %vm1031, %v1187, 0
        %v1194 = vsel %vm1031, %v1189, 0
        %1196 = vmatprep.subr.bf16.mxu0 0
        %1197 = vmatpush1.bf16.xpose.msra.mxu0 0
        %1198 = vmatprep.subr.bf16.mxu0 0
        %1199 = vmatpush1.bf16.xpose.msra.mxu0 0
        %1200 = vmatprep.subr.bf16.mxu0 0
        %1201 = vmatpush1.bf16.xpose.msra.mxu0 0
        %1202 = vmatprep.subr.bf16.mxu0 0
        %1203 = vmatpush1.bf16.xpose.msra.mxu0 0
        %1204 = vmatprep.subr.bf16.mxu0 0
        %1205 = vmatpush1.bf16.xpose.msra.mxu0 0
        %1206 = vmatprep.subr.bf16.mxu0 0
        %1207 = vmatpush1.bf16.xpose.msra.mxu0 0
        %1208 = vmatprep.subr.bf16.mxu0 0
        %1209 = vmatpush1.bf16.xpose.msra.mxu0 0
        %1210 = vmatprep.subr.bf16.mxu0 0
        %1211 = vmatpush1.bf16.xpose.msra.mxu0 %v1194
        %1212 = vmatprep.subr.bf16.mxu0 0
        %1213 = vmatpush2.bf16.xpose.msra.mxu0 0
        %1214 = vmatprep.subr.bf16.mxu0 0
        %1215 = vmatpush2.bf16.xpose.msra.mxu0 0
        %1216 = vmatprep.subr.bf16.mxu0 0
        %1217 = vmatpush2.bf16.xpose.msra.mxu0 0
        %1218 = vmatprep.subr.bf16.mxu0 0
        %1219 = vmatpush2.bf16.xpose.msra.mxu0 0
        %1220 = vmatprep.subr.bf16.mxu0 0
        %1221 = vmatpush2.bf16.xpose.msra.mxu0 0
        %1222 = vmatprep.subr.bf16.mxu0 0
        %1223 = vmatpush2.bf16.xpose.msra.mxu0 0
        %1224 = vmatprep.subr.bf16.mxu0 0
        %1225 = vmatpush2.bf16.xpose.msra.mxu0 0
        %1226 = vmatprep.subr.bf16.mxu0 0
        %1227 = vmatpush2.bf16.xpose.msra.mxu0 0
        %1228 = vmatprep.mubr.bf16.mxu0 0
        %1229 = vmatmul.mubr.bf16.gmra.mxu0 %v1191
        %v1230 = vpop.f32.mrf.mxu0
        %v1231 = vadd.f32 0.0, %v1230
        %v1232 = vpop.f32.mrf.mxu0
        %v1233 = vpop.f32.mrf.mxu0
        %v1234 = vpop.f32.mrf.mxu0
        %1235 = vdwg.mxu0
        %v1236 = vmul.f32 %v1231, 0.35355338
        %v1237 = vsel %vm1030, -1e+09, %v1236
        %v1238 = vmax.f32 %v1079, %v1133
        %v1239 = vmax.f32 %v1238, %v1185
        %v1240 = vmax.f32 %v1239, %v1237
        %v1241 = vsub.f32 %v1079, %v1240
        %v1242 = vmul.f32 %v1241, 1.442695
        %v1243 = vpow.pop %v1242
        %v1244 = vsub.f32 %v1133, %v1240
        %v1245 = vmul.f32 %v1244, 1.442695
        %v1246 = vpow.pop %v1245
        %v1247 = vsub.f32 %v1185, %v1240
        %v1248 = vmul.f32 %v1247, 1.442695
        %v1249 = vpow.pop %v1248
        %v1250 = vsub.f32 %v1237, %v1240
        %v1251 = vmul.f32 %v1250, 1.442695
        %v1252 = vpow.pop %v1251
        %v1253 = vadd.f32 %v1243, %v1246
        %v1254 = vadd.f32 %v1253, %v1249
        %v1255 = vadd.f32 %v1254, %v1252
        %v1256 = vrcp.pop %v1255
        %v1257 = vmul.f32 %v1243, %v1256
        %v1258 = vpack.c.bf16 %v1257, %v1257
        %v1260 = vsel %vm1031, %v1258, 0
        %vm1262 = vcmask 1043456
        %v1264 = vsel %vm1262, %v1029, 0
        %1266 = vmatprep.subr.bf16.mxu0 0
        %1267 = vmatpush1.bf16.msra.mxu0 0
        %1268 = vmatprep.subr.bf16.mxu0 0
        %1269 = vmatpush1.bf16.msra.mxu0 0
        %1270 = vmatprep.subr.bf16.mxu0 0
        %1271 = vmatpush1.bf16.msra.mxu0 0
        %1272 = vmatprep.subr.bf16.mxu0 0
        %1273 = vmatpush1.bf16.msra.mxu0 0
        %1274 = vmatprep.subr.bf16.mxu0 0
        %1275 = vmatpush1.bf16.msra.mxu0 0
        %1276 = vmatprep.subr.bf16.mxu0 0
        %1277 = vmatpush1.bf16.msra.mxu0 0
        %1278 = vmatprep.subr.bf16.mxu0 0
        %1279 = vmatpush1.bf16.msra.mxu0 0
        %1280 = vmatprep.subr.bf16.mxu0 0
        %1281 = vmatpush1.bf16.msra.mxu0 %v1264
        %1282 = vmatprep.subr.bf16.mxu0 0
        %1283 = vmatpush2.bf16.msra.mxu0 0
        %1284 = vmatprep.subr.bf16.mxu0 0
        %1285 = vmatpush2.bf16.msra.mxu0 0
        %1286 = vmatprep.subr.bf16.mxu0 0
        %1287 = vmatpush2.bf16.msra.mxu0 0
        %1288 = vmatprep.subr.bf16.mxu0 0
        %1289 = vmatpush2.bf16.msra.mxu0 0
        %1290 = vmatprep.subr.bf16.mxu0 0
        %1291 = vmatpush2.bf16.msra.mxu0 0
        %1292 = vmatprep.subr.bf16.mxu0 0
        %1293 = vmatpush2.bf16.msra.mxu0 0
        %1294 = vmatprep.subr.bf16.mxu0 0
        %1295 = vmatpush2.bf16.msra.mxu0 0
        %1296 = vmatprep.subr.bf16.mxu0 0
        %1297 = vmatpush2.bf16.msra.mxu0 0
        %1298 = vmatprep.mubr.bf16.mxu0 0
        %1299 = vmatmul.mubr.bf16.gmra.mxu0 %v1260
        %v1300 = vpop.f32.mrf.mxu0
        %v1301 = vadd.f32 0.0, %v1300
        %v1302 = vpop.f32.mrf.mxu0
        %v1303 = vpop.f32.mrf.mxu0
        %v1304 = vpop.f32.mrf.mxu0
        %1305 = vdwg.mxu0
        %v1306 = vpack.c.bf16 %v1301, %v1301
        %v1307 = vld [vmem:[%s10] sm:$0xf]
        %v1308 = vmul.f32 %v1246, %v1256
        %v1309 = vpack.c.bf16 %v1308, %v1308
        %1311 = vrot.lane.b32.xlu0 %v1029, 120
        %v1312 = vpop.permute.xlu0 %1311
        %v1314 = vsel %vm1031, %v1309, 0
        %v1317 = vsel %vm1262, %v1312, 0
        %1319 = vmatprep.subr.bf16.mxu0 0
        %1320 = vmatpush1.bf16.msra.mxu0 0
        %1321 = vmatprep.subr.bf16.mxu0 0
        %1322 = vmatpush1.bf16.msra.mxu0 0
        %1323 = vmatprep.subr.bf16.mxu0 0
        %1324 = vmatpush1.bf16.msra.mxu0 0
        %1325 = vmatprep.subr.bf16.mxu0 0
        %1326 = vmatpush1.bf16.msra.mxu0 0
        %1327 = vmatprep.subr.bf16.mxu0 0
        %1328 = vmatpush1.bf16.msra.mxu0 0
        %1329 = vmatprep.subr.bf16.mxu0 0
        %1330 = vmatpush1.bf16.msra.mxu0 0
        %1331 = vmatprep.subr.bf16.mxu0 0
        %1332 = vmatpush1.bf16.msra.mxu0 0
        %1333 = vmatprep.subr.bf16.mxu0 0
        %1334 = vmatpush1.bf16.msra.mxu0 %v1317
        %1335 = vmatprep.subr.bf16.mxu0 0
        %1336 = vmatpush2.bf16.msra.mxu0 0
        %1337 = vmatprep.subr.bf16.mxu0 0
        %1338 = vmatpush2.bf16.msra.mxu0 0
        %1339 = vmatprep.subr.bf16.mxu0 0
        %1340 = vmatpush2.bf16.msra.mxu0 0
        %1341 = vmatprep.subr.bf16.mxu0 0
        %1342 = vmatpush2.bf16.msra.mxu0 0
        %1343 = vmatprep.subr.bf16.mxu0 0
        %1344 = vmatpush2.bf16.msra.mxu0 0
        %1345 = vmatprep.subr.bf16.mxu0 0
        %1346 = vmatpush2.bf16.msra.mxu0 0
        %1347 = vmatprep.subr.bf16.mxu0 0
        %1348 = vmatpush2.bf16.msra.mxu0 0
        %1349 = vmatprep.subr.bf16.mxu0 0
        %1350 = vmatpush2.bf16.msra.mxu0 0
        %1351 = vmatprep.mubr.bf16.mxu0 0
        %1352 = vmatmul.mubr.bf16.gmra.mxu0 %v1314
        %v1353 = vpop.f32.mrf.mxu0
        %v1354 = vadd.f32 0.0, %v1353
        %v1355 = vpop.f32.mrf.mxu0
        %v1356 = vpop.f32.mrf.mxu0
        %v1357 = vpop.f32.mrf.mxu0
        %1358 = vdwg.mxu0
        %v1359 = vpack.c.bf16 %v1354, %v1354
        %v1360 = vld [vmem:[%s10 + $0x4] sm:$0xf]
        %v1362 = vsel %vm1031, %v1359, 0
        %v1365 = vsel %vm1262, %v1360, 0
        %1367 = vmatprep.subr.bf16.mxu0 0
        %1368 = vmatpush1.bf16.msra.mxu0 0
        %1369 = vmatprep.subr.bf16.mxu0 0
        %1370 = vmatpush1.bf16.msra.mxu0 0
        %1371 = vmatprep.subr.bf16.mxu0 0
        %1372 = vmatpush1.bf16.msra.mxu0 0
        %1373 = vmatprep.subr.bf16.mxu0 0
        %1374 = vmatpush1.bf16.msra.mxu0 0
        %1375 = vmatprep.subr.bf16.mxu0 0
        %1376 = vmatpush1.bf16.msra.mxu0 0
        %1377 = vmatprep.subr.bf16.mxu0 0
        %1378 = vmatpush1.bf16.msra.mxu0 0
        %1379 = vmatprep.subr.bf16.mxu0 0
        %1380 = vmatpush1.bf16.msra.mxu0 0
        %1381 = vmatprep.subr.bf16.mxu0 0
        %1382 = vmatpush1.bf16.msra.mxu0 %v1365
        %1383 = vmatprep.subr.bf16.mxu0 0
        %1384 = vmatpush2.bf16.msra.mxu0 0
        %1385 = vmatprep.subr.bf16.mxu0 0
        %1386 = vmatpush2.bf16.msra.mxu0 0
        %1387 = vmatprep.subr.bf16.mxu0 0
        %1388 = vmatpush2.bf16.msra.mxu0 0
        %1389 = vmatprep.subr.bf16.mxu0 0
        %1390 = vmatpush2.bf16.msra.mxu0 0
        %1391 = vmatprep.subr.bf16.mxu0 0
        %1392 = vmatpush2.bf16.msra.mxu0 0
        %1393 = vmatprep.subr.bf16.mxu0 0
        %1394 = vmatpush2.bf16.msra.mxu0 0
        %1395 = vmatprep.subr.bf16.mxu0 0
        %1396 = vmatpush2.bf16.msra.mxu0 0
        %1397 = vmatprep.subr.bf16.mxu0 0
        %1398 = vmatpush2.bf16.msra.mxu0 0
        %1399 = vmatprep.mubr.bf16.mxu0 0
        %1400 = vmatmul.mubr.bf16.gmra.mxu0 %v1362
        %v1401 = vpop.f32.mrf.mxu0
        %v1402 = vadd.f32 0.0, %v1401
        %v1403 = vpop.f32.mrf.mxu0
        %v1404 = vpop.f32.mrf.mxu0
        %v1405 = vpop.f32.mrf.mxu0
        %1406 = vdwg.mxu0
        %v1408 = vsel %vm1031, %v1306, 0
        %v1411 = vsel %vm1262, %v1307, 0
        %1413 = vmatprep.subr.bf16.mxu0 0
        %1414 = vmatpush1.bf16.msra.mxu0 0
        %1415 = vmatprep.subr.bf16.mxu0 0
        %1416 = vmatpush1.bf16.msra.mxu0 0
        %1417 = vmatprep.subr.bf16.mxu0 0
        %1418 = vmatpush1.bf16.msra.mxu0 0
        %1419 = vmatprep.subr.bf16.mxu0 0
        %1420 = vmatpush1.bf16.msra.mxu0 0
        %1421 = vmatprep.subr.bf16.mxu0 0
        %1422 = vmatpush1.bf16.msra.mxu0 0
        %1423 = vmatprep.subr.bf16.mxu0 0
        %1424 = vmatpush1.bf16.msra.mxu0 0
        %1425 = vmatprep.subr.bf16.mxu0 0
        %1426 = vmatpush1.bf16.msra.mxu0 0
        %1427 = vmatprep.subr.bf16.mxu0 0
        %1428 = vmatpush1.bf16.msra.mxu0 %v1411
        %1429 = vmatprep.subr.bf16.mxu0 0
        %1430 = vmatpush2.bf16.msra.mxu0 0
        %1431 = vmatprep.subr.bf16.mxu0 0
        %1432 = vmatpush2.bf16.msra.mxu0 0
        %1433 = vmatprep.subr.bf16.mxu0 0
        %1434 = vmatpush2.bf16.msra.mxu0 0
        %1435 = vmatprep.subr.bf16.mxu0 0
        %1436 = vmatpush2.bf16.msra.mxu0 0
        %1437 = vmatprep.subr.bf16.mxu0 0
        %1438 = vmatpush2.bf16.msra.mxu0 0
        %1439 = vmatprep.subr.bf16.mxu0 0
        %1440 = vmatpush2.bf16.msra.mxu0 0
        %1441 = vmatprep.subr.bf16.mxu0 0
        %1442 = vmatpush2.bf16.msra.mxu0 0
        %1443 = vmatprep.subr.bf16.mxu0 0
        %1444 = vmatpush2.bf16.msra.mxu0 0
        %1445 = vmatprep.mubr.bf16.mxu0 0
        %1446 = vmatmul.mubr.bf16.gmra.mxu0 %v1408
        %v1447 = vpop.f32.mrf.mxu0
        %v1448 = vadd.f32 %v1402, %v1447
        %v1449 = vpop.f32.mrf.mxu0
        %v1450 = vpop.f32.mrf.mxu0
        %v1451 = vpop.f32.mrf.mxu0
        %1452 = vdwg.mxu0
        %v1453 = vmul.f32 %v1249, %v1256
        %v1454 = vpack.c.bf16 %v1453, %v1453
        %1455 = vrot.lane.b32.xlu0 %v1029, 112
        %v1456 = vpop.permute.xlu0 %1455
        %v1458 = vsel %vm1031, %v1454, 0
        %v1461 = vsel %vm1262, %v1456, 0
        %1463 = vmatprep.subr.bf16.mxu0 0
        %1464 = vmatpush1.bf16.msra.mxu0 0
        %1465 = vmatprep.subr.bf16.mxu0 0
        %1466 = vmatpush1.bf16.msra.mxu0 0
        %1467 = vmatprep.subr.bf16.mxu0 0
        %1468 = vmatpush1.bf16.msra.mxu0 0
        %1469 = vmatprep.subr.bf16.mxu0 0
        %1470 = vmatpush1.bf16.msra.mxu0 0
        %1471 = vmatprep.subr.bf16.mxu0 0
        %1472 = vmatpush1.bf16.msra.mxu0 0
        %1473 = vmatprep.subr.bf16.mxu0 0
        %1474 = vmatpush1.bf16.msra.mxu0 0
        %1475 = vmatprep.subr.bf16.mxu0 0
        %1476 = vmatpush1.bf16.msra.mxu0 0
        %1477 = vmatprep.subr.bf16.mxu0 0
        %1478 = vmatpush1.bf16.msra.mxu0 %v1461
        %1479 = vmatprep.subr.bf16.mxu0 0
        %1480 = vmatpush2.bf16.msra.mxu0 0
        %1481 = vmatprep.subr.bf16.mxu0 0
        %1482 = vmatpush2.bf16.msra.mxu0 0
        %1483 = vmatprep.subr.bf16.mxu0 0
        %1484 = vmatpush2.bf16.msra.mxu0 0
        %1485 = vmatprep.subr.bf16.mxu0 0
        %1486 = vmatpush2.bf16.msra.mxu0 0
        %1487 = vmatprep.subr.bf16.mxu0 0
        %1488 = vmatpush2.bf16.msra.mxu0 0
        %1489 = vmatprep.subr.bf16.mxu0 0
        %1490 = vmatpush2.bf16.msra.mxu0 0
        %1491 = vmatprep.subr.bf16.mxu0 0
        %1492 = vmatpush2.bf16.msra.mxu0 0
        %1493 = vmatprep.subr.bf16.mxu0 0
        %1494 = vmatpush2.bf16.msra.mxu0 0
        %1495 = vmatprep.mubr.bf16.mxu0 0
        %1496 = vmatmul.mubr.bf16.gmra.mxu0 %v1458
        %v1497 = vpop.f32.mrf.mxu0
        %v1498 = vadd.f32 0.0, %v1497
        %v1499 = vpop.f32.mrf.mxu0
        %v1500 = vpop.f32.mrf.mxu0
        %v1501 = vpop.f32.mrf.mxu0
        %1502 = vdwg.mxu0
        %v1503 = vpack.c.bf16 %v1498, %v1498
        %v1504 = vld [vmem:[%s10 + $0x8] sm:$0xf]
        %v1506 = vsel %vm1031, %v1503, 0
        %v1509 = vsel %vm1262, %v1504, 0
        %1511 = vmatprep.subr.bf16.mxu0 0
        %1512 = vmatpush1.bf16.msra.mxu0 0
        %1513 = vmatprep.subr.bf16.mxu0 0
        %1514 = vmatpush1.bf16.msra.mxu0 0
        %1515 = vmatprep.subr.bf16.mxu0 0
        %1516 = vmatpush1.bf16.msra.mxu0 0
        %1517 = vmatprep.subr.bf16.mxu0 0
        %1518 = vmatpush1.bf16.msra.mxu0 0
        %1519 = vmatprep.subr.bf16.mxu0 0
        %1520 = vmatpush1.bf16.msra.mxu0 0
        %1521 = vmatprep.subr.bf16.mxu0 0
        %1522 = vmatpush1.bf16.msra.mxu0 0
        %1523 = vmatprep.subr.bf16.mxu0 0
        %1524 = vmatpush1.bf16.msra.mxu0 0
        %1525 = vmatprep.subr.bf16.mxu0 0
        %1526 = vmatpush1.bf16.msra.mxu0 %v1509
        %1527 = vmatprep.subr.bf16.mxu0 0
        %1528 = vmatpush2.bf16.msra.mxu0 0
        %1529 = vmatprep.subr.bf16.mxu0 0
        %1530 = vmatpush2.bf16.msra.mxu0 0
        %1531 = vmatprep.subr.bf16.mxu0 0
        %1532 = vmatpush2.bf16.msra.mxu0 0
        %1533 = vmatprep.subr.bf16.mxu0 0
        %1534 = vmatpush2.bf16.msra.mxu0 0
        %1535 = vmatprep.subr.bf16.mxu0 0
        %1536 = vmatpush2.bf16.msra.mxu0 0
        %1537 = vmatprep.subr.bf16.mxu0 0
        %1538 = vmatpush2.bf16.msra.mxu0 0
        %1539 = vmatprep.subr.bf16.mxu0 0
        %1540 = vmatpush2.bf16.msra.mxu0 0
        %1541 = vmatprep.subr.bf16.mxu0 0
        %1542 = vmatpush2.bf16.msra.mxu0 0
        %1543 = vmatprep.mubr.bf16.mxu0 0
        %1544 = vmatmul.mubr.bf16.gmra.mxu0 %v1506
        %v1545 = vpop.f32.mrf.mxu0
        %v1546 = vadd.f32 0.0, %v1545
        %v1547 = vpop.f32.mrf.mxu0
        %v1548 = vpop.f32.mrf.mxu0
        %v1549 = vpop.f32.mrf.mxu0
        %1550 = vdwg.mxu0
        %v1551 = vadd.f32 %v1448, %v1546
        %v1552 = vmul.f32 %v1252, %v1256
        %v1553 = vpack.c.bf16 %v1552, %v1552
        %1554 = vrot.lane.b32.xlu0 %v1029, 104
        %v1555 = vpop.permute.xlu0 %1554
        %v1557 = vsel %vm1031, %v1553, 0
        %v1560 = vsel %vm1262, %v1555, 0
        %1562 = vmatprep.subr.bf16.mxu0 0
        %1563 = vmatpush1.bf16.msra.mxu0 0
        %1564 = vmatprep.subr.bf16.mxu0 0
        %1565 = vmatpush1.bf16.msra.mxu0 0
        %1566 = vmatprep.subr.bf16.mxu0 0
        %1567 = vmatpush1.bf16.msra.mxu0 0
        %1568 = vmatprep.subr.bf16.mxu0 0
        %1569 = vmatpush1.bf16.msra.mxu0 0
        %1570 = vmatprep.subr.bf16.mxu0 0
        %1571 = vmatpush1.bf16.msra.mxu0 0
        %1572 = vmatprep.subr.bf16.mxu0 0
        %1573 = vmatpush1.bf16.msra.mxu0 0
        %1574 = vmatprep.subr.bf16.mxu0 0
        %1575 = vmatpush1.bf16.msra.mxu0 0
        %1576 = vmatprep.subr.bf16.mxu0 0
        %1577 = vmatpush1.bf16.msra.mxu0 %v1560
        %1578 = vmatprep.subr.bf16.mxu0 0
        %1579 = vmatpush2.bf16.msra.mxu0 0
        %1580 = vmatprep.subr.bf16.mxu0 0
        %1581 = vmatpush2.bf16.msra.mxu0 0
        %1582 = vmatprep.subr.bf16.mxu0 0
        %1583 = vmatpush2.bf16.msra.mxu0 0
        %1584 = vmatprep.subr.bf16.mxu0 0
        %1585 = vmatpush2.bf16.msra.mxu0 0
        %1586 = vmatprep.subr.bf16.mxu0 0
        %1587 = vmatpush2.bf16.msra.mxu0 0
        %1588 = vmatprep.subr.bf16.mxu0 0
        %1589 = vmatpush2.bf16.msra.mxu0 0
        %1590 = vmatprep.subr.bf16.mxu0 0
        %1591 = vmatpush2.bf16.msra.mxu0 0
        %1592 = vmatprep.subr.bf16.mxu0 0
        %1593 = vmatpush2.bf16.msra.mxu0 0
        %1594 = vmatprep.mubr.bf16.mxu0 0
        %1595 = vmatmul.mubr.bf16.gmra.mxu0 %v1557
        %v1596 = vpop.f32.mrf.mxu0
        %v1597 = vadd.f32 0.0, %v1596
        %v1598 = vpop.f32.mrf.mxu0
        %v1599 = vpop.f32.mrf.mxu0
        %v1600 = vpop.f32.mrf.mxu0
        %1601 = vdwg.mxu0
        %v1602 = vpack.c.bf16 %v1597, %v1597
        %v1603 = vld [vmem:[%s10 + $0xc] sm:$0xf]
        %v1605 = vsel %vm1031, %v1602, 0
        %v1608 = vsel %vm1262, %v1603, 0
        %1610 = vmatprep.subr.bf16.mxu0 0
        %1611 = vmatpush1.bf16.msra.mxu0 0
        %1612 = vmatprep.subr.bf16.mxu0 0
        %1613 = vmatpush1.bf16.msra.mxu0 0
        %1614 = vmatprep.subr.bf16.mxu0 0
        %1615 = vmatpush1.bf16.msra.mxu0 0
        %1616 = vmatprep.subr.bf16.mxu0 0
        %1617 = vmatpush1.bf16.msra.mxu0 0
        %1618 = vmatprep.subr.bf16.mxu0 0
        %1619 = vmatpush1.bf16.msra.mxu0 0
        %1620 = vmatprep.subr.bf16.mxu0 0
        %1621 = vmatpush1.bf16.msra.mxu0 0
        %1622 = vmatprep.subr.bf16.mxu0 0
        %1623 = vmatpush1.bf16.msra.mxu0 0
        %1624 = vmatprep.subr.bf16.mxu0 0
        %1625 = vmatpush1.bf16.msra.mxu0 %v1608
        %1626 = vmatprep.subr.bf16.mxu0 0
        %1627 = vmatpush2.bf16.msra.mxu0 0
        %1628 = vmatprep.subr.bf16.mxu0 0
        %1629 = vmatpush2.bf16.msra.mxu0 0
        %1630 = vmatprep.subr.bf16.mxu0 0
        %1631 = vmatpush2.bf16.msra.mxu0 0
        %1632 = vmatprep.subr.bf16.mxu0 0
        %1633 = vmatpush2.bf16.msra.mxu0 0
        %1634 = vmatprep.subr.bf16.mxu0 0
        %1635 = vmatpush2.bf16.msra.mxu0 0
        %1636 = vmatprep.subr.bf16.mxu0 0
        %1637 = vmatpush2.bf16.msra.mxu0 0
        %1638 = vmatprep.subr.bf16.mxu0 0
        %1639 = vmatpush2.bf16.msra.mxu0 0
        %1640 = vmatprep.subr.bf16.mxu0 0
        %1641 = vmatpush2.bf16.msra.mxu0 0
        %1642 = vmatprep.mubr.bf16.mxu0 0
        %1643 = vmatmul.mubr.bf16.gmra.mxu0 %v1605
        %v1644 = vpop.f32.mrf.mxu0
        %v1645 = vadd.f32 0.0, %v1644
        %v1646 = vpop.f32.mrf.mxu0
        %v1647 = vpop.f32.mrf.mxu0
        %v1648 = vpop.f32.mrf.mxu0
        %1649 = vdwg.mxu0
        %v1650 = vadd.f32 %v1551, %v1645
        %v1651 = vld [vmem:[%s11] sm:$0x1]
        %v1653 = vlaneseq
        %v1654 = vshrl.u32 %v1653, 7
        %v1655 = vsub.s32 0, %v1654
        %v1656 = vrot.slane %v1651, %v1655
        %v1658 = vadd.f32 %v1650, %v1656
        %v1659 = vadd.f32 %v828, %v1658
        %v1660 = vsel %vm857, %v1659, 0.0
        %1661 = vadd.xlane.f32.xlu0 %v1660
        %v1662 = vpop.xlane.xlu0 %1661
        %v1663 = vrcp.pop 32.0
        %v1664 = vmul.f32 %v1662, %v1663
        %v1665 = vsub.f32 %v1659, %v1664
        %v1666 = vmul.f32 %v1665, %v1665
        %v1667 = vsel %vm857, %v1666, 0.0
        %1668 = vadd.xlane.f32.xlu0 %v1667
        %v1669 = vpop.xlane.xlu0 %1668
        %v1670 = vmul.f32 %v1669, %v1663
        %v1671 = vadd.f32 %v1670, 1e-05
        %v1672 = vrsqrt.pop %v1671
        %v1673 = vmul.f32 %v1665, %v1672
        %v1674 = vld [vmem:[%s16] sm:$0x1]
        %v1676 = vlaneseq
        %v1677 = vshrl.u32 %v1676, 7
        %v1678 = vsub.s32 0, %v1677
        %v1679 = vrot.slane %v1674, %v1678
        %v1681 = vmul.f32 %v1673, %v1679
        %v1682 = vld [vmem:[%s17] sm:$0x1]
        %v1684 = vlaneseq
        %v1685 = vshrl.u32 %v1684, 7
        %v1686 = vsub.s32 0, %v1685
        %v1687 = vrot.slane %v1682, %v1686
        %v1689 = vadd.f32 %v1681, %v1687
        %v1690 = vld [vmem:[#allocation16] sm:$0xf]
        %v1691 = vld [vmem:[#allocation16 + $0x4] sm:$0xf]
        %v1692 = vld [vmem:[#allocation16 + $0x8] sm:$0xf]
        %v1693 = vld [vmem:[#allocation16 + $0xc] sm:$0xf]
        %v1694 = vpack.c.bf16 %v1689, %v1689
        %v1695 = vld [vmem:[%s13] sm:$0x1]
        %v1697 = vlaneseq
        %v1698 = vshrl.u32 %v1697, 7
        %v1699 = vsub.s32 0, %v1698
        %v1700 = vrot.slane %v1695, %v1699
        %v1706 = vunpack.c.l.b16 %v1690
        %v1707 = vunpack.c.l.b16 %v1691
        %v1708 = vunpack.c.l.b16 %v1692
        %v1709 = vunpack.c.l.b16 %v1693
        %v1710 = vpack.c.b16 %v1707, %v1706
        %v1711 = vpack.c.b16 %v1709, %v1708
        %v1715 = vsel %vm857, %v1694, 0
        %1717 = vmatprep.subr.bf16.mxu0 0
        %1718 = vmatpush1.bf16.msra.mxu0 0
        %1719 = vmatprep.subr.bf16.mxu0 0
        %1720 = vmatpush1.bf16.msra.mxu0 0
        %1721 = vmatprep.subr.bf16.mxu0 0
        %1722 = vmatpush1.bf16.msra.mxu0 0
        %1723 = vmatprep.subr.bf16.mxu0 0
        %1724 = vmatpush1.bf16.msra.mxu0 0
        %1725 = vmatprep.subr.bf16.mxu0 0
        %1726 = vmatpush1.bf16.msra.mxu0 0
        %1727 = vmatprep.subr.bf16.mxu0 0
        %1728 = vmatpush1.bf16.msra.mxu0 0
        %1729 = vmatprep.subr.bf16.mxu0 0
        %1730 = vmatpush1.bf16.msra.mxu0 %v1711
        %1731 = vmatprep.subr.bf16.mxu0 0
        %1732 = vmatpush1.bf16.msra.mxu0 %v1710
        %1733 = vmatprep.subr.bf16.mxu0 0
        %1734 = vmatpush2.bf16.msra.mxu0 0
        %1735 = vmatprep.subr.bf16.mxu0 0
        %1736 = vmatpush2.bf16.msra.mxu0 0
        %1737 = vmatprep.subr.bf16.mxu0 0
        %1738 = vmatpush2.bf16.msra.mxu0 0
        %1739 = vmatprep.subr.bf16.mxu0 0
        %1740 = vmatpush2.bf16.msra.mxu0 0
        %1741 = vmatprep.subr.bf16.mxu0 0
        %1742 = vmatpush2.bf16.msra.mxu0 0
        %1743 = vmatprep.subr.bf16.mxu0 0
        %1744 = vmatpush2.bf16.msra.mxu0 0
        %1745 = vmatprep.subr.bf16.mxu0 0
        %1746 = vmatpush2.bf16.msra.mxu0 0
        %1747 = vmatprep.subr.bf16.mxu0 0
        %1748 = vmatpush2.bf16.msra.mxu0 0
        %1749 = vmatprep.mubr.bf16.mxu0 0
        %1750 = vmatmul.mubr.bf16.gmra.mxu0 %v1715
        %v1751 = vpop.f32.mrf.mxu0
        %v1752 = vadd.f32 %v1700, %v1751
        %v1753 = vpop.f32.mrf.mxu0
        %v1754 = vpop.f32.mrf.mxu0
        %v1755 = vpop.f32.mrf.mxu0
        %1756 = vdwg.mxu0
        %v1757 = vmax.f32 %v1752, 0.0
        %v1758 = vld [vmem:[%s14] sm:$0xf]
        %v1759 = vld [vmem:[%s14 + $0x4] sm:$0xf]
        %v1760 = vld [vmem:[%s14 + $0x8] sm:$0xf]
        %v1761 = vld [vmem:[%s14 + $0xc] sm:$0xf]
        %v1762 = vld [vmem:[%s14 + $0x10] sm:$0xf]
        %v1763 = vld [vmem:[%s14 + $0x14] sm:$0xf]
        %v1764 = vld [vmem:[%s14 + $0x18] sm:$0xf]
        %v1765 = vld [vmem:[%s14 + $0x1c] sm:$0xf]
        %v1766 = vpack.c.bf16 %v1757, %v1757
        %v1767 = vld [vmem:[%s15] sm:$0x1]
        %v1769 = vlaneseq
        %v1770 = vshrl.u32 %v1769, 7
        %v1771 = vsub.s32 0, %v1770
        %v1772 = vrot.slane %v1767, %v1771
        %v1782 = vunpack.c.l.b16 %v1758
        %v1783 = vunpack.c.l.b16 %v1759
        %v1784 = vunpack.c.l.b16 %v1760
        %v1785 = vunpack.c.l.b16 %v1761
        %v1786 = vunpack.c.l.b16 %v1762
        %v1787 = vunpack.c.l.b16 %v1763
        %v1788 = vunpack.c.l.b16 %v1764
        %v1789 = vunpack.c.l.b16 %v1765
        %v1790 = vpack.c.b16 %v1783, %v1782
        %v1791 = vpack.c.b16 %v1785, %v1784
        %v1792 = vpack.c.b16 %v1787, %v1786
        %v1793 = vpack.c.b16 %v1789, %v1788
        %vm1798 = vcmask 523264
        %v1800 = vsel %vm1798, %v1766, 0
        %1802 = vmatprep.subr.bf16.mxu0 0
        %1803 = vmatpush1.bf16.msra.mxu0 0
        %1804 = vmatprep.subr.bf16.mxu0 0
        %1805 = vmatpush1.bf16.msra.mxu0 0
        %1806 = vmatprep.subr.bf16.mxu0 0
        %1807 = vmatpush1.bf16.msra.mxu0 0
        %1808 = vmatprep.subr.bf16.mxu0 0
        %1809 = vmatpush1.bf16.msra.mxu0 0
        %1810 = vmatprep.subr.bf16.mxu0 0
        %1811 = vmatpush1.bf16.msra.mxu0 %v1793
        %1812 = vmatprep.subr.bf16.mxu0 0
        %1813 = vmatpush1.bf16.msra.mxu0 %v1792
        %1814 = vmatprep.subr.bf16.mxu0 0
        %1815 = vmatpush1.bf16.msra.mxu0 %v1791
        %1816 = vmatprep.subr.bf16.mxu0 0
        %1817 = vmatpush1.bf16.msra.mxu0 %v1790
        %1818 = vmatprep.subr.bf16.mxu0 0
        %1819 = vmatpush2.bf16.msra.mxu0 0
        %1820 = vmatprep.subr.bf16.mxu0 0
        %1821 = vmatpush2.bf16.msra.mxu0 0
        %1822 = vmatprep.subr.bf16.mxu0 0
        %1823 = vmatpush2.bf16.msra.mxu0 0
        %1824 = vmatprep.subr.bf16.mxu0 0
        %1825 = vmatpush2.bf16.msra.mxu0 0
        %1826 = vmatprep.subr.bf16.mxu0 0
        %1827 = vmatpush2.bf16.msra.mxu0 0
        %1828 = vmatprep.subr.bf16.mxu0 0
        %1829 = vmatpush2.bf16.msra.mxu0 0
        %1830 = vmatprep.subr.bf16.mxu0 0
        %1831 = vmatpush2.bf16.msra.mxu0 0
        %1832 = vmatprep.subr.bf16.mxu0 0
        %1833 = vmatpush2.bf16.msra.mxu0 0
        %1834 = vmatprep.mubr.bf16.mxu0 0
        %1835 = vmatmul.mubr.bf16.gmra.mxu0 %v1800
        %v1836 = vpop.f32.mrf.mxu0
        %v1837 = vadd.f32 %v1772, %v1836
        %v1838 = vpop.f32.mrf.mxu0
        %v1839 = vpop.f32.mrf.mxu0
        %v1840 = vpop.f32.mrf.mxu0
        %1841 = vdwg.mxu0
        %v1842 = vadd.f32 %v1689, %v1837
        %v1843 = vsel %vm857, %v1842, 0.0
        %1844 = vadd.xlane.f32.xlu0 %v1843
        %v1845 = vpop.xlane.xlu0 %1844
        %v1846 = vmul.f32 %v1845, %v1663
        %v1847 = vsub.f32 %v1842, %v1846
        %v1848 = vmul.f32 %v1847, %v1847
        %v1849 = vsel %vm857, %v1848, 0.0
        %1850 = vadd.xlane.f32.xlu0 %v1849
        %v1851 = vpop.xlane.xlu0 %1850
        %v1852 = vmul.f32 %v1851, %v1663
        %v1853 = vadd.f32 %v1852, 1e-05
        %v1854 = vrsqrt.pop %v1853
        %v1855 = vmul.f32 %v1847, %v1854
        %v1856 = vld [vmem:[%s18] sm:$0x1]
        %v1858 = vlaneseq
        %v1859 = vshrl.u32 %v1858, 7
        %v1860 = vsub.s32 0, %v1859
        %v1861 = vrot.slane %v1856, %v1860
        %v1863 = vmul.f32 %v1855, %v1861
        %v1864 = vld [vmem:[%s19] sm:$0x1]
        %v1866 = vlaneseq
        %v1867 = vshrl.u32 %v1866, 7
        %v1868 = vsub.s32 0, %v1867
        %v1869 = vrot.slane %v1864, %v1868
        %v1871 = vadd.f32 %v1863, %v1869
        %1872 = vst.msk [vmem:[%s765] sm:$0xff] %vm857, %v1871
        %s1873 = sand.u32 %s479, 1
        %s1874 = scalar_lea.sflag [#allocation4], %s1873
        %s1875 = sand.u32 %s479, 1
        %s1876 = smul.addr %s1875, 8
        %s1877 = scalar_lea.vmem [#allocation17], %s1876
        // Predicated region
        $region137: #{tpu_custom_call.1} parent=99 // pred_check
          %p1878 = pneg %p489
        $region138: #{tpu_custom_call.1} parent=99 // pred_check_branch
          %1880 = sbr.rel (%p1878) target = $region140
        $region139: #{tpu_custom_call.1} parent=99 // pred_region
          %s1882 = ssub.s32 128, 128
          %1883 = vsyncadd %s1874, %s1882
          %s1884 = smul.addr %s41, 128
          %s1885 = scalar_lea.hbm %s20, %s1884
          %s1887 = sshll.u32 %s1877, 4
          %s1888 = int_to_ptr.vmem [resolvable:$true] %s1887
          %1890 = dma.vmem_to_hbm [thread:$0]  %s1888, 128, %s1885, %s1874
        $region140: #{tpu_custom_call.1} parent=99 // pred_fallthru
          _
      $region100: #{tpu_custom_call.1} parent=5 // pred_fallthru
        _
      %p1891 = scmp.le.s32.totalorder 2, %s36
      // Predicated region
      $region141: #{tpu_custom_call.1} parent=5 // pred_check
        %p1892 = pneg %p1891
      $region142: #{tpu_custom_call.1} parent=5 // pred_check_branch
        %1894 = sbr.rel (%p1892) target = $region144
      $region143: #{tpu_custom_call.1} parent=5 // pred_region
        %s1895 = ssub.s32 %s36, 2
        // Predicated region
        $region145: #{tpu_custom_call.1} parent=143 // pred_check
          %p1896 = pneg %p495
        $region146: #{tpu_custom_call.1} parent=143 // pred_check_branch
          %1898 = sbr.rel (%p1896) target = $region148
        $region147: #{tpu_custom_call.1} parent=143 // pred_region
          %s1899 = sand.u32 %s480, 1
          %s1900 = scalar_lea.sflag [#allocation4], %s1899
          %s1901 = sand.u32 %s480, 1
          %s1902 = smul.addr %s1901, 8
          %s1903 = scalar_lea.vmem [#allocation17], %s1902
          %1904 = dma.done %s1900, 128
        $region148: #{tpu_custom_call.1} parent=143 // pred_fallthru
          _
      $region144: #{tpu_custom_call.1} parent=5 // pred_fallthru
        _
    $region6: #{tpu_custom_call.1} parent=1 // loop_footer
      %s40 = sadd.s32 1, %s36
    $region7: #{tpu_custom_call.1} parent=1 // loop_footer_branch
      %35 = sbr.rel target = $region3
    $region8: #{tpu_custom_call.1} parent=1 // loop_exit
      _
    %1905 = vsyncpa [#allocation3], 1
    %s1906 = scalar_lea.sflag [#allocation3], 1
    %1907 = vsyncpa %s1906, 1
    %1908 = vsyncpa [#allocation6], 1
    %1909 = vsyncpa [#allocation9], 1
    %1910 = vsyncpa [#allocation12], 1
    %1911 = vsyncpa [#allocation15], 1
    %1912 = vsyncpa [#allocation4], 1
    %s1913 = scalar_lea.sflag [#allocation4], 1
    %1914 = vsyncpa %s1913, 1

</llo_original>
